<compile_context>
chip_gen: v5e
topology: v5e:2x2
jax: 0.10.0
libtpu: 0.0.40
codegen_flags: <defaults>
</compile_context>

<pallas_src>
import math

import jax
import jax.numpy as jnp
from jax.experimental import pallas as pl
from jax.experimental.pallas import tpu as pltpu

# ---- model / test sizes (small, consistent with the module's forward) ----
N_LAYERS = 2
N_HEADS = 4
D_MODEL = 32
D_FF = 64
SEQ = 8
BATCH = 2
EPS = 1e-6

DK = D_MODEL // N_HEADS
SCALE = 1.0 / math.sqrt(DK)

# vector slab layout: (8, 128) per layer, one field per sublane row, lane 0 aligned
#   row 0: ln1 gamma   row 1: ln1 beta
#   row 2: [bq|bk|bv]  row 3: bo
#   row 4: ln2 gamma   row 5: ln2 beta
#   row 6: b1          row 7: b2


def _layer_norm(t, g, b):
    # Annotated-Transformer LayerNorm: a_2 * (x - mean) / (std + eps) + b_2,
    # torch's default *unbiased* std (divide by n-1). Inverse via EUP.
    d = t.shape[-1]
    mean = jnp.sum(t, axis=-1, keepdims=True) * (1.0 / d)
    var = jnp.sum((t - mean) ** 2, axis=-1, keepdims=True) * (1.0 / (d - 1))
    inv = pl.reciprocal(jnp.sqrt(var) + EPS, approx=True)   # EUP slot
    return g * (t - mean) * inv + b


def encoder_kernel(x_ref, mask_ref, wqkv_ref, wo_ref, w1_ref, w2_ref, vec_ref,
                   out_ref):
    S, D = SEQ, D_MODEL
    x = x_ref[0].astype(jnp.float32)                       # (S, D)

    # ---- hoisted additive attention bias (computed once, broadcast once) ----
    m = mask_ref[0]                                        # (1, S)
    neg_bias = jnp.where(m == 0.0, -1e9, 0.0)              # (1, S) f32
    neg_bias = jnp.broadcast_to(neg_bias, (N_HEADS * S, S))  # (H*S, S)

    for layer in range(N_LAYERS):                          # static unroll
        wqkv = wqkv_ref[layer]                             # (D, 3D)  bf16
        wo = wo_ref[layer]                                 # (D, D)   bf16
        w1 = w1_ref[layer]                                 # (D, DFF) bf16
        w2 = w2_ref[layer]                                 # (DFF, D) bf16
        vec = vec_ref[layer]                               # (8, 128) f32

        ln1_g = vec[0:1, 0:D]
        ln1_b = vec[1:2, 0:D]
        bqkv = vec[2:3, 0:3 * D]
        bo = vec[3:4, 0:D]
        ln2_g = vec[4:5, 0:D]
        ln2_b = vec[5:6, 0:D]
        b1 = vec[6:7, 0:D_FF]
        b2 = vec[7:8, 0:D]

        # ---------- sublayer 1: x + SelfAttn(LayerNorm(x)) ----------
        h = _layer_norm(x, ln1_g, ln1_b)                   # (S, D) f32
        qkv = jnp.dot(h.astype(jnp.bfloat16), wqkv,
                      preferred_element_type=jnp.float32) + bqkv   # (S, 3D) f32
        q = qkv[:, 0:D].astype(jnp.bfloat16)
        k = qkv[:, D:2 * D].astype(jnp.bfloat16)
        v = qkv[:, 2 * D:3 * D].astype(jnp.bfloat16)

        # per-head score tiles, stacked along sublanes for ONE batched softmax
        s_heads = []
        for i in range(N_HEADS):                           # static unroll
            qi = q[:, i * DK:(i + 1) * DK]                 # (S, dk) bf16
            ki = k[:, i * DK:(i + 1) * DK]
            s_heads.append(jnp.dot(qi, ki.T, preferred_element_type=jnp.float32))
        s_all = jnp.concatenate(s_heads, axis=0) * SCALE + neg_bias   # (H*S, S)

        # single softmax chain over all heads (1 XLU max, 1 exp, 1 sum, 1 rcp)
        s_all = s_all - jnp.max(s_all, axis=-1, keepdims=True)
        p_all = jnp.exp(s_all)
        p_all = p_all * pl.reciprocal(jnp.sum(p_all, axis=-1, keepdims=True),
                                      approx=True)

        # per-head P @ V; heads placed in their lane slot (D = 32 <= 128)
        heads = []
        for i in range(N_HEADS):                           # static unroll
            pi = p_all[i * S:(i + 1) * S, :].astype(jnp.bfloat16)   # (S, S)
            vi = v[:, i * DK:(i + 1) * DK]                           # (S, dk)
            heads.append(jnp.dot(pi, vi, preferred_element_type=jnp.float32))
        attn_in = jnp.concatenate(heads, axis=-1).astype(jnp.bfloat16)   # (S, D)

        # ONE output projection per layer
        attn = jnp.dot(attn_in, wo, preferred_element_type=jnp.float32) + bo
        x = x + attn

        # ---------- sublayer 2: x + FFN(LayerNorm(x)) ----------
        h2 = _layer_norm(x, ln2_g, ln2_b)
        f = jnp.dot(h2.astype(jnp.bfloat16), w1,
                    preferred_element_type=jnp.float32) + b1
        f = jnp.maximum(f, 0.0)
        x = x + jnp.dot(f.astype(jnp.bfloat16), w2,
                        preferred_element_type=jnp.float32) + b2

    out_ref[0] = x.astype(out_ref.dtype)


def pack_params(layers):
    """Pack per-layer params into per-kind stacks (lane-0 aligned, bf16 weights)."""
    wqkvs, wos, w1s, w2s, vecs = [], [], [], [], []
    for p in layers:
        (ln1g, ln1b, wq, bq, wk, bk, wv, bv, wo, bo,
         ln2g, ln2b, w1, b1, w2, b2) = p
        wqkvs.append(jnp.concatenate([wq, wk, wv], axis=1).astype(jnp.bfloat16))
        wos.append(wo.astype(jnp.bfloat16))
        w1s.append(w1.astype(jnp.bfloat16))
        w2s.append(w2.astype(jnp.bfloat16))
        vec = jnp.zeros((8, 128), jnp.float32)
        vec = vec.at[0, :D_MODEL].set(ln1g[0])
        vec = vec.at[1, :D_MODEL].set(ln1b[0])
        vec = vec.at[2, :3 * D_MODEL].set(jnp.concatenate([bq, bk, bv], axis=1)[0])
        vec = vec.at[3, :D_MODEL].set(bo[0])
        vec = vec.at[4, :D_MODEL].set(ln2g[0])
        vec = vec.at[5, :D_MODEL].set(ln2b[0])
        vec = vec.at[6, :D_FF].set(b1[0])
        vec = vec.at[7, :D_MODEL].set(b2[0])
        vecs.append(vec)
    return (jnp.stack(wqkvs), jnp.stack(wos), jnp.stack(w1s),
            jnp.stack(w2s), jnp.stack(vecs))


def encoder_pallas(x, mask, layers):
    wqkv, wo, w1, w2, vec = pack_params(layers)
    B, S, D = x.shape

    # advisory cost estimate for XLA's scheduler
    flops_per_layer = (
        2 * B * S * D * (3 * D)                 # QKV projection
        + 2 * B * N_HEADS * S * S * DK * 2      # Q@K^T and P@V
        + 2 * B * S * D * D                     # Wo projection
        + 2 * B * S * D * D_FF                  # W1
        + 2 * B * S * D_FF * D                  # W2
    )
    transc_per_layer = B * N_HEADS * S * S + 6 * B * S     # exp + rsqrt/recip
    bytes_accessed = (2 * x.size * 4 + mask.size * 4
                      + (wqkv.size + wo.size + w1.size + w2.size) * 2
                      + vec.size * 4)
    cost = pl.CostEstimate(flops=N_LAYERS * flops_per_layer,
                           transcendentals=N_LAYERS * transc_per_layer,
                           bytes_accessed=bytes_accessed)

    return pl.pallas_call(
        encoder_kernel,
        out_shape=jax.ShapeDtypeStruct((B, S, D), x.dtype),
        grid=(B,),
        in_specs=[
            pl.BlockSpec((1, S, D), lambda b: (b, 0, 0)),          # x
            pl.BlockSpec((1, 1, S), lambda b: (b, 0, 0)),          # src_mask
            pl.BlockSpec(wqkv.shape, lambda b: (0, 0, 0)),         # Wqkv stack
            pl.BlockSpec(wo.shape, lambda b: (0, 0, 0)),           # Wo stack
            pl.BlockSpec(w1.shape, lambda b: (0, 0, 0)),           # W1 stack
            pl.BlockSpec(w2.shape, lambda b: (0, 0, 0)),           # W2 stack
            pl.BlockSpec(vec.shape, lambda b: (0, 0, 0)),          # vec slab
        ],
        out_specs=pl.BlockSpec((1, S, D), lambda b: (b, 0, 0)),
        compiler_params=pltpu.CompilerParams(
            dimension_semantics=("parallel",)),                    # v7x: 2 TCs
        cost_estimate=cost,
    )(x, mask, wqkv, wo, w1, w2, vec)


# ---------------- deterministic parameter init (synthetic) ----------------
def init_encoder_params(key, n_layers, d_model, d_ff):
    layers = []
    for l in range(n_layers):
        ks = jax.random.split(jax.random.fold_in(key, l), 6)

        def lin(k, shape):
            return (jax.random.normal(k, shape, jnp.float32) * 0.05).astype(jnp.float32)

        params = [
            jnp.ones((1, d_model), jnp.float32),    # ln1 gamma (a_2)
            jnp.zeros((1, d_model), jnp.float32),   # ln1 beta  (b_2)
            lin(ks[0], (d_model, d_model)), jnp.zeros((1, d_model), jnp.float32),  # Wq, bq
            lin(ks[1], (d_model, d_model)), jnp.zeros((1, d_model), jnp.float32),  # Wk, bk
            lin(ks[2], (d_model, d_model)), jnp.zeros((1, d_model), jnp.float32),  # Wv, bv
            lin(ks[3], (d_model, d_model)), jnp.zeros((1, d_model), jnp.float32),  # Wo, bo
            jnp.ones((1, d_model), jnp.float32),    # ln2 gamma
            jnp.zeros((1, d_model), jnp.float32),   # ln2 beta
            lin(ks[4], (d_model, d_ff)), jnp.zeros((1, d_ff), jnp.float32),        # W1, b1
            lin(ks[5], (d_ff, d_model)), jnp.zeros((1, d_model), jnp.float32),     # W2, b2
        ]
        layers.append(params)
    return layers


# ---------------- pure-JAX f32 reference for correctness ----------------
def encoder_ref(x, mask, layers):
    for p in layers:
        (ln1g, ln1b, wq, bq, wk, bk, wv, bv, wo, bo,
         ln2g, ln2b, w1, b1, w2, b2) = p
        B, S, D = x.shape
        dk = D // N_HEADS

        def ln(t, g, b):
            mean = t.mean(-1, keepdims=True)
            std = jnp.sqrt(((t - mean) ** 2).sum(-1, keepdims=True) / (D - 1))
            return g * (t - mean) / (std + EPS) + b

        h = ln(x, ln1g, ln1b)
        q = h @ wq + bq
        k = h @ wk + bk
        v = h @ wv + bv
        qh = q.reshape(B, S, N_HEADS, dk).transpose(0, 2, 1, 3)
        kh = k.reshape(B, S, N_HEADS, dk).transpose(0, 2, 1, 3)
        vh = v.reshape(B, S, N_HEADS, dk).transpose(0, 2, 1, 3)
        s = jnp.einsum('bhqd,bhkd->bhqk', qh, kh) / math.sqrt(dk)
        s = jnp.where(mask[:, None, :, :] == 0, -1e9, s)
        pr = jax.nn.softmax(s, axis=-1)
        a = jnp.einsum('bhqk,bhkd->bhqd', pr, vh).transpose(0, 2, 1, 3).reshape(B, S, D)
        x = x + (a @ wo + bo)
        h2 = ln(x, ln2g, ln2b)
        x = x + (jax.nn.relu(h2 @ w1 + b1) @ w2 + b2)
    return x


if __name__ == "__main__":
    key = jax.random.PRNGKey(0)
    kx, kp = jax.random.split(key)

    x = jax.random.normal(kx, (BATCH, SEQ, D_MODEL), jnp.float32)
    # src_mask: 1 = attend, 0 = masked; mask out the last two positions of batch 1
    mask = jnp.ones((BATCH, 1, SEQ), jnp.float32)
    mask = mask.at[1, 0, SEQ - 2:].set(0.0)

    layers = init_encoder_params(kp, N_LAYERS, D_MODEL, D_FF)

    out = encoder_pallas(x, mask, layers)
    out = jax.block_until_ready(out)

    ref = encoder_ref(x, mask, layers)
    assert out.shape == (BATCH, SEQ, D_MODEL)
    # bf16 MXU operands (f32 accumulation) vs. full-f32 reference: 1e-2 tolerance.
    assert jnp.allclose(out, ref, rtol=1e-2, atol=1e-2), "mismatch vs pure-JAX reference"

    print("KERNEL_OK")
</pallas_src>

<mosaic_0001>
module attributes {stable_mosaic.version = 11 : i64} {
  func.func @encoder_kernel(%arg0: i32, %arg1: memref<1x8x32xf32, #tpu.memory_space<vmem>>, %arg2: memref<1x1x8xf32, #tpu.memory_space<vmem>>, %arg3: memref<2x32x96xbf16, #tpu.memory_space<vmem>>, %arg4: memref<2x32x32xbf16, #tpu.memory_space<vmem>>, %arg5: memref<2x32x64xbf16, #tpu.memory_space<vmem>>, %arg6: memref<2x64x32xbf16, #tpu.memory_space<vmem>>, %arg7: memref<2x8x128xf32, #tpu.memory_space<vmem>>, %arg8: memref<1x8x32xf32, #tpu.memory_space<vmem>>) attributes {dimension_semantics = [#tpu.dimension_semantics<parallel>], iteration_bounds = array<i64: 2>, scalar_prefetch = 0 : i64, scratch_operands = 0 : i64, tpu.core_type = #tpu.core_type<tc>, window_params = [{transform_indices = @transform_0, window_bounds = array<i64: 1, 8, 32>}, {transform_indices = @transform_1, window_bounds = array<i64: 1, 1, 8>}, {pipeline_mode = #tpu.pipeline_mode<synchronous>, transform_indices = @transform_2, window_bounds = array<i64: 2, 32, 96>}, {pipeline_mode = #tpu.pipeline_mode<synchronous>, transform_indices = @transform_3, window_bounds = array<i64: 2, 32, 32>}, {pipeline_mode = #tpu.pipeline_mode<synchronous>, transform_indices = @transform_4, window_bounds = array<i64: 2, 32, 64>}, {pipeline_mode = #tpu.pipeline_mode<synchronous>, transform_indices = @transform_5, window_bounds = array<i64: 2, 64, 32>}, {pipeline_mode = #tpu.pipeline_mode<synchronous>, transform_indices = @transform_6, window_bounds = array<i64: 2, 8, 128>}, {transform_indices = @transform_7, window_bounds = array<i64: 1, 8, 32>}]} {
    %c0 = arith.constant 0 : index
    %c0_0 = arith.constant 0 : index
    %c0_1 = arith.constant 0 : index
    %0 = vector.load %arg1[%c0, %c0_0, %c0_1] : memref<1x8x32xf32, #tpu.memory_space<vmem>>, vector<1x8x32xf32>
    %1 = vector.shape_cast %0 : vector<1x8x32xf32> to vector<8x32xf32>
    %c0_2 = arith.constant 0 : index
    %c0_3 = arith.constant 0 : index
    %c0_4 = arith.constant 0 : index
    %2 = vector.load %arg2[%c0_2, %c0_3, %c0_4] : memref<1x1x8xf32, #tpu.memory_space<vmem>>, vector<1x1x8xf32>
    %3 = vector.shape_cast %2 : vector<1x1x8xf32> to vector<1x8xf32>
    %cst = arith.constant 0.000000e+00 : f32
    %4 = vector.broadcast %cst : f32 to vector<1x8xf32>
    %5 = arith.cmpf oeq, %3, %4 : vector<1x8xf32>
    %cst_5 = arith.constant -1.000000e+09 : f32
    %cst_6 = arith.constant 0.000000e+00 : f32
    %6 = vector.broadcast %cst_5 : f32 to vector<1x8xf32>
    %7 = vector.broadcast %cst_6 : f32 to vector<1x8xf32>
    %8 = arith.select %5, %6, %7 : vector<1x8xi1>, vector<1x8xf32>
    %9 = vector.shape_cast %8 : vector<1x8xf32> to vector<1x8xf32>
    %10 = vector.broadcast %9 : vector<1x8xf32> to vector<32x8xf32>
    %c0_7 = arith.constant 0 : index
    %c0_8 = arith.constant 0 : index
    %c0_9 = arith.constant 0 : index
    %11 = vector.load %arg3[%c0_7, %c0_8, %c0_9] : memref<2x32x96xbf16, #tpu.memory_space<vmem>>, vector<1x32x96xbf16>
    %12 = vector.shape_cast %11 : vector<1x32x96xbf16> to vector<32x96xbf16>
    %c0_10 = arith.constant 0 : index
    %c0_11 = arith.constant 0 : index
    %c0_12 = arith.constant 0 : index
    %13 = vector.load %arg4[%c0_10, %c0_11, %c0_12] : memref<2x32x32xbf16, #tpu.memory_space<vmem>>, vector<1x32x32xbf16>
    %14 = vector.shape_cast %13 : vector<1x32x32xbf16> to vector<32x32xbf16>
    %c0_13 = arith.constant 0 : index
    %c0_14 = arith.constant 0 : index
    %c0_15 = arith.constant 0 : index
    %15 = vector.load %arg5[%c0_13, %c0_14, %c0_15] : memref<2x32x64xbf16, #tpu.memory_space<vmem>>, vector<1x32x64xbf16>
    %16 = vector.shape_cast %15 : vector<1x32x64xbf16> to vector<32x64xbf16>
    %c0_16 = arith.constant 0 : index
    %c0_17 = arith.constant 0 : index
    %c0_18 = arith.constant 0 : index
    %17 = vector.load %arg6[%c0_16, %c0_17, %c0_18] : memref<2x64x32xbf16, #tpu.memory_space<vmem>>, vector<1x64x32xbf16>
    %18 = vector.shape_cast %17 : vector<1x64x32xbf16> to vector<64x32xbf16>
    %c0_19 = arith.constant 0 : index
    %c0_20 = arith.constant 0 : index
    %c0_21 = arith.constant 0 : index
    %19 = vector.load %arg7[%c0_19, %c0_20, %c0_21] : memref<2x8x128xf32, #tpu.memory_space<vmem>>, vector<1x8x128xf32>
    %20 = vector.shape_cast %19 : vector<1x8x128xf32> to vector<8x128xf32>
    %21 = vector.extract_strided_slice %20 {offsets = [0, 0], sizes = [1, 32], strides = [1, 1]} : vector<8x128xf32> to vector<1x32xf32>
    %22 = vector.extract_strided_slice %20 {offsets = [1, 0], sizes = [1, 32], strides = [1, 1]} : vector<8x128xf32> to vector<1x32xf32>
    %23 = vector.extract_strided_slice %20 {offsets = [2, 0], sizes = [1, 96], strides = [1, 1]} : vector<8x128xf32> to vector<1x96xf32>
    %24 = vector.extract_strided_slice %20 {offsets = [3, 0], sizes = [1, 32], strides = [1, 1]} : vector<8x128xf32> to vector<1x32xf32>
    %25 = vector.extract_strided_slice %20 {offsets = [4, 0], sizes = [1, 32], strides = [1, 1]} : vector<8x128xf32> to vector<1x32xf32>
    %26 = vector.extract_strided_slice %20 {offsets = [5, 0], sizes = [1, 32], strides = [1, 1]} : vector<8x128xf32> to vector<1x32xf32>
    %27 = vector.extract_strided_slice %20 {offsets = [6, 0], sizes = [1, 64], strides = [1, 1]} : vector<8x128xf32> to vector<1x64xf32>
    %28 = vector.extract_strided_slice %20 {offsets = [7, 0], sizes = [1, 32], strides = [1, 1]} : vector<8x128xf32> to vector<1x32xf32>
    %cst_22 = arith.constant dense<0.000000e+00> : vector<8xf32>
    %29 = vector.multi_reduction <add>, %1, %cst_22 [1] : vector<8x32xf32> to vector<8xf32>
    %30 = vector.shape_cast %29 : vector<8xf32> to vector<8x1xf32>
    %cst_23 = arith.constant 3.125000e-02 : f32
    %31 = vector.broadcast %cst_23 : f32 to vector<8x1xf32>
    %32 = arith.mulf %30, %31 : vector<8x1xf32>
    %33 = vector.broadcast %32 : vector<8x1xf32> to vector<8x32xf32>
    %34 = arith.subf %1, %33 : vector<8x32xf32>
    %35 = arith.mulf %34, %34 : vector<8x32xf32>
    %cst_24 = arith.constant dense<0.000000e+00> : vector<8xf32>
    %36 = vector.multi_reduction <add>, %35, %cst_24 [1] : vector<8x32xf32> to vector<8xf32>
    %37 = vector.shape_cast %36 : vector<8xf32> to vector<8x1xf32>
    %cst_25 = arith.constant 0.0322580636 : f32
    %38 = vector.broadcast %cst_25 : f32 to vector<8x1xf32>
    %39 = arith.mulf %37, %38 : vector<8x1xf32>
    %40 = math.sqrt %39 : vector<8x1xf32>
    %cst_26 = arith.constant 9.99999997E-7 : f32
    %41 = vector.broadcast %cst_26 : f32 to vector<8x1xf32>
    %42 = arith.addf %40, %41 : vector<8x1xf32>
    %43 = tpu.reciprocal %42 {approx = true} : vector<8x1xf32> -> vector<8x1xf32>
    %44 = vector.broadcast %32 : vector<8x1xf32> to vector<8x32xf32>
    %45 = arith.subf %1, %44 : vector<8x32xf32>
    %46 = vector.broadcast %21 : vector<1x32xf32> to vector<8x32xf32>
    %47 = arith.mulf %46, %45 : vector<8x32xf32>
    %48 = vector.broadcast %43 : vector<8x1xf32> to vector<8x32xf32>
    %49 = arith.mulf %47, %48 : vector<8x32xf32>
    %50 = vector.broadcast %22 : vector<1x32xf32> to vector<8x32xf32>
    %51 = arith.addf %49, %50 : vector<8x32xf32>
    %52 = arith.truncf %51 : vector<8x32xf32> to vector<8x32xbf16>
    %cst_27 = arith.constant dense<0.000000e+00> : vector<8x96xf32>
    %53 = tpu.matmul %52, %12, %cst_27 {dimension_numbers = #tpu.dot_dimension_numbers<[1], [0], [0], [1], [0, 0, 1, 1], [], []>} : vector<8x32xbf16>, vector<32x96xbf16>, vector<8x96xf32> -> vector<8x96xf32>
    %54 = vector.broadcast %23 : vector<1x96xf32> to vector<8x96xf32>
    %55 = arith.addf %53, %54 : vector<8x96xf32>
    %56 = vector.extract_strided_slice %55 {offsets = [0, 0], sizes = [8, 32], strides = [1, 1]} : vector<8x96xf32> to vector<8x32xf32>
    %57 = arith.truncf %56 : vector<8x32xf32> to vector<8x32xbf16>
    %58 = vector.extract_strided_slice %55 {offsets = [0, 32], sizes = [8, 32], strides = [1, 1]} : vector<8x96xf32> to vector<8x32xf32>
    %59 = arith.truncf %58 : vector<8x32xf32> to vector<8x32xbf16>
    %60 = vector.extract_strided_slice %55 {offsets = [0, 64], sizes = [8, 32], strides = [1, 1]} : vector<8x96xf32> to vector<8x32xf32>
    %61 = arith.truncf %60 : vector<8x32xf32> to vector<8x32xbf16>
    %62 = vector.extract_strided_slice %57 {offsets = [0, 0], sizes = [8, 8], strides = [1, 1]} : vector<8x32xbf16> to vector<8x8xbf16>
    %63 = vector.extract_strided_slice %59 {offsets = [0, 0], sizes = [8, 8], strides = [1, 1]} : vector<8x32xbf16> to vector<8x8xbf16>
    %64 = tpu.transpose %63, [1, 0] : vector<8x8xbf16> -> vector<8x8xbf16>
    %cst_28 = arith.constant dense<0.000000e+00> : vector<8x8xf32>
    %65 = tpu.matmul %62, %64, %cst_28 {dimension_numbers = #tpu.dot_dimension_numbers<[1], [0], [0], [1], [0, 0, 1, 1], [], []>} : vector<8x8xbf16>, vector<8x8xbf16>, vector<8x8xf32> -> vector<8x8xf32>
    %66 = vector.extract_strided_slice %57 {offsets = [0, 8], sizes = [8, 8], strides = [1, 1]} : vector<8x32xbf16> to vector<8x8xbf16>
    %67 = vector.extract_strided_slice %59 {offsets = [0, 8], sizes = [8, 8], strides = [1, 1]} : vector<8x32xbf16> to vector<8x8xbf16>
    %68 = tpu.transpose %67, [1, 0] : vector<8x8xbf16> -> vector<8x8xbf16>
    %cst_29 = arith.constant dense<0.000000e+00> : vector<8x8xf32>
    %69 = tpu.matmul %66, %68, %cst_29 {dimension_numbers = #tpu.dot_dimension_numbers<[1], [0], [0], [1], [0, 0, 1, 1], [], []>} : vector<8x8xbf16>, vector<8x8xbf16>, vector<8x8xf32> -> vector<8x8xf32>
    %70 = vector.extract_strided_slice %57 {offsets = [0, 16], sizes = [8, 8], strides = [1, 1]} : vector<8x32xbf16> to vector<8x8xbf16>
    %71 = vector.extract_strided_slice %59 {offsets = [0, 16], sizes = [8, 8], strides = [1, 1]} : vector<8x32xbf16> to vector<8x8xbf16>
    %72 = tpu.transpose %71, [1, 0] : vector<8x8xbf16> -> vector<8x8xbf16>
    %cst_30 = arith.constant dense<0.000000e+00> : vector<8x8xf32>
    %73 = tpu.matmul %70, %72, %cst_30 {dimension_numbers = #tpu.dot_dimension_numbers<[1], [0], [0], [1], [0, 0, 1, 1], [], []>} : vector<8x8xbf16>, vector<8x8xbf16>, vector<8x8xf32> -> vector<8x8xf32>
    %74 = vector.extract_strided_slice %57 {offsets = [0, 24], sizes = [8, 8], strides = [1, 1]} : vector<8x32xbf16> to vector<8x8xbf16>
    %75 = vector.extract_strided_slice %59 {offsets = [0, 24], sizes = [8, 8], strides = [1, 1]} : vector<8x32xbf16> to vector<8x8xbf16>
    %76 = tpu.transpose %75, [1, 0] : vector<8x8xbf16> -> vector<8x8xbf16>
    %cst_31 = arith.constant dense<0.000000e+00> : vector<8x8xf32>
    %77 = tpu.matmul %74, %76, %cst_31 {dimension_numbers = #tpu.dot_dimension_numbers<[1], [0], [0], [1], [0, 0, 1, 1], [], []>} : vector<8x8xbf16>, vector<8x8xbf16>, vector<8x8xf32> -> vector<8x8xf32>
    %78 = tpu.concatenate %65, %69, %73, %77 in 0 : vector<8x8xf32>, vector<8x8xf32>, vector<8x8xf32>, vector<8x8xf32> -> vector<32x8xf32>
    %cst_32 = arith.constant 0.353553385 : f32
    %79 = vector.broadcast %cst_32 : f32 to vector<32x8xf32>
    %80 = arith.mulf %78, %79 : vector<32x8xf32>
    %81 = arith.addf %80, %10 : vector<32x8xf32>
    %cst_33 = arith.constant dense<0xFF800000> : vector<32xf32>
    %82 = vector.multi_reduction <maximumf>, %81, %cst_33 [1] : vector<32x8xf32> to vector<32xf32>
    %83 = vector.shape_cast %82 : vector<32xf32> to vector<32x1xf32>
    %84 = vector.broadcast %83 : vector<32x1xf32> to vector<32x8xf32>
    %85 = arith.subf %81, %84 : vector<32x8xf32>
    %86 = math.exp %85 : vector<32x8xf32>
    %cst_34 = arith.constant dense<0.000000e+00> : vector<32xf32>
    %87 = vector.multi_reduction <add>, %86, %cst_34 [1] : vector<32x8xf32> to vector<32xf32>
    %88 = vector.shape_cast %87 : vector<32xf32> to vector<32x1xf32>
    %89 = tpu.reciprocal %88 {approx = true} : vector<32x1xf32> -> vector<32x1xf32>
    %90 = vector.broadcast %89 : vector<32x1xf32> to vector<32x8xf32>
    %91 = arith.mulf %86, %90 : vector<32x8xf32>
    %92 = vector.extract_strided_slice %91 {offsets = [0, 0], sizes = [8, 8], strides = [1, 1]} : vector<32x8xf32> to vector<8x8xf32>
    %93 = arith.truncf %92 : vector<8x8xf32> to vector<8x8xbf16>
    %94 = vector.extract_strided_slice %61 {offsets = [0, 0], sizes = [8, 8], strides = [1, 1]} : vector<8x32xbf16> to vector<8x8xbf16>
    %cst_35 = arith.constant dense<0.000000e+00> : vector<8x8xf32>
    %95 = tpu.matmul %93, %94, %cst_35 {dimension_numbers = #tpu.dot_dimension_numbers<[1], [0], [0], [1], [0, 0, 1, 1], [], []>} : vector<8x8xbf16>, vector<8x8xbf16>, vector<8x8xf32> -> vector<8x8xf32>
    %96 = vector.extract_strided_slice %91 {offsets = [8, 0], sizes = [8, 8], strides = [1, 1]} : vector<32x8xf32> to vector<8x8xf32>
    %97 = arith.truncf %96 : vector<8x8xf32> to vector<8x8xbf16>
    %98 = vector.extract_strided_slice %61 {offsets = [0, 8], sizes = [8, 8], strides = [1, 1]} : vector<8x32xbf16> to vector<8x8xbf16>
    %cst_36 = arith.constant dense<0.000000e+00> : vector<8x8xf32>
    %99 = tpu.matmul %97, %98, %cst_36 {dimension_numbers = #tpu.dot_dimension_numbers<[1], [0], [0], [1], [0, 0, 1, 1], [], []>} : vector<8x8xbf16>, vector<8x8xbf16>, vector<8x8xf32> -> vector<8x8xf32>
    %100 = vector.extract_strided_slice %91 {offsets = [16, 0], sizes = [8, 8], strides = [1, 1]} : vector<32x8xf32> to vector<8x8xf32>
    %101 = arith.truncf %100 : vector<8x8xf32> to vector<8x8xbf16>
    %102 = vector.extract_strided_slice %61 {offsets = [0, 16], sizes = [8, 8], strides = [1, 1]} : vector<8x32xbf16> to vector<8x8xbf16>
    %cst_37 = arith.constant dense<0.000000e+00> : vector<8x8xf32>
    %103 = tpu.matmul %101, %102, %cst_37 {dimension_numbers = #tpu.dot_dimension_numbers<[1], [0], [0], [1], [0, 0, 1, 1], [], []>} : vector<8x8xbf16>, vector<8x8xbf16>, vector<8x8xf32> -> vector<8x8xf32>
    %104 = vector.extract_strided_slice %91 {offsets = [24, 0], sizes = [8, 8], strides = [1, 1]} : vector<32x8xf32> to vector<8x8xf32>
    %105 = arith.truncf %104 : vector<8x8xf32> to vector<8x8xbf16>
    %106 = vector.extract_strided_slice %61 {offsets = [0, 24], sizes = [8, 8], strides = [1, 1]} : vector<8x32xbf16> to vector<8x8xbf16>
    %cst_38 = arith.constant dense<0.000000e+00> : vector<8x8xf32>
    %107 = tpu.matmul %105, %106, %cst_38 {dimension_numbers = #tpu.dot_dimension_numbers<[1], [0], [0], [1], [0, 0, 1, 1], [], []>} : vector<8x8xbf16>, vector<8x8xbf16>, vector<8x8xf32> -> vector<8x8xf32>
    %108 = tpu.concatenate %95, %99, %103, %107 in 1 : vector<8x8xf32>, vector<8x8xf32>, vector<8x8xf32>, vector<8x8xf32> -> vector<8x32xf32>
    %109 = arith.truncf %108 : vector<8x32xf32> to vector<8x32xbf16>
    %cst_39 = arith.constant dense<0.000000e+00> : vector<8x32xf32>
    %110 = tpu.matmul %109, %14, %cst_39 {dimension_numbers = #tpu.dot_dimension_numbers<[1], [0], [0], [1], [0, 0, 1, 1], [], []>} : vector<8x32xbf16>, vector<32x32xbf16>, vector<8x32xf32> -> vector<8x32xf32>
    %111 = vector.broadcast %24 : vector<1x32xf32> to vector<8x32xf32>
    %112 = arith.addf %110, %111 : vector<8x32xf32>
    %113 = arith.addf %1, %112 : vector<8x32xf32>
    %cst_40 = arith.constant dense<0.000000e+00> : vector<8xf32>
    %114 = vector.multi_reduction <add>, %113, %cst_40 [1] : vector<8x32xf32> to vector<8xf32>
    %115 = vector.shape_cast %114 : vector<8xf32> to vector<8x1xf32>
    %cst_41 = arith.constant 3.125000e-02 : f32
    %116 = vector.broadcast %cst_41 : f32 to vector<8x1xf32>
    %117 = arith.mulf %115, %116 : vector<8x1xf32>
    %118 = vector.broadcast %117 : vector<8x1xf32> to vector<8x32xf32>
    %119 = arith.subf %113, %118 : vector<8x32xf32>
    %120 = arith.mulf %119, %119 : vector<8x32xf32>
    %cst_42 = arith.constant dense<0.000000e+00> : vector<8xf32>
    %121 = vector.multi_reduction <add>, %120, %cst_42 [1] : vector<8x32xf32> to vector<8xf32>
    %122 = vector.shape_cast %121 : vector<8xf32> to vector<8x1xf32>
    %cst_43 = arith.constant 0.0322580636 : f32
    %123 = vector.broadcast %cst_43 : f32 to vector<8x1xf32>
    %124 = arith.mulf %122, %123 : vector<8x1xf32>
    %125 = math.sqrt %124 : vector<8x1xf32>
    %cst_44 = arith.constant 9.99999997E-7 : f32
    %126 = vector.broadcast %cst_44 : f32 to vector<8x1xf32>
    %127 = arith.addf %125, %126 : vector<8x1xf32>
    %128 = tpu.reciprocal %127 {approx = true} : vector<8x1xf32> -> vector<8x1xf32>
    %129 = vector.broadcast %117 : vector<8x1xf32> to vector<8x32xf32>
    %130 = arith.subf %113, %129 : vector<8x32xf32>
    %131 = vector.broadcast %25 : vector<1x32xf32> to vector<8x32xf32>
    %132 = arith.mulf %131, %130 : vector<8x32xf32>
    %133 = vector.broadcast %128 : vector<8x1xf32> to vector<8x32xf32>
    %134 = arith.mulf %132, %133 : vector<8x32xf32>
    %135 = vector.broadcast %26 : vector<1x32xf32> to vector<8x32xf32>
    %136 = arith.addf %134, %135 : vector<8x32xf32>
    %137 = arith.truncf %136 : vector<8x32xf32> to vector<8x32xbf16>
    %cst_45 = arith.constant dense<0.000000e+00> : vector<8x64xf32>
    %138 = tpu.matmul %137, %16, %cst_45 {dimension_numbers = #tpu.dot_dimension_numbers<[1], [0], [0], [1], [0, 0, 1, 1], [], []>} : vector<8x32xbf16>, vector<32x64xbf16>, vector<8x64xf32> -> vector<8x64xf32>
    %139 = vector.broadcast %27 : vector<1x64xf32> to vector<8x64xf32>
    %140 = arith.addf %138, %139 : vector<8x64xf32>
    %cst_46 = arith.constant 0.000000e+00 : f32
    %141 = vector.broadcast %cst_46 : f32 to vector<8x64xf32>
    %142 = arith.maximumf %140, %141 : vector<8x64xf32>
    %143 = arith.truncf %142 : vector<8x64xf32> to vector<8x64xbf16>
    %cst_47 = arith.constant dense<0.000000e+00> : vector<8x32xf32>
    %144 = tpu.matmul %143, %18, %cst_47 {dimension_numbers = #tpu.dot_dimension_numbers<[1], [0], [0], [1], [0, 0, 1, 1], [], []>} : vector<8x64xbf16>, vector<64x32xbf16>, vector<8x32xf32> -> vector<8x32xf32>
    %145 = arith.addf %113, %144 : vector<8x32xf32>
    %146 = vector.broadcast %28 : vector<1x32xf32> to vector<8x32xf32>
    %147 = arith.addf %145, %146 : vector<8x32xf32>
    %c1 = arith.constant 1 : index
    %c0_48 = arith.constant 0 : index
    %c0_49 = arith.constant 0 : index
    %148 = vector.load %arg3[%c1, %c0_48, %c0_49] : memref<2x32x96xbf16, #tpu.memory_space<vmem>>, vector<1x32x96xbf16>
    %149 = vector.shape_cast %148 : vector<1x32x96xbf16> to vector<32x96xbf16>
    %c1_50 = arith.constant 1 : index
    %c0_51 = arith.constant 0 : index
    %c0_52 = arith.constant 0 : index
    %150 = vector.load %arg4[%c1_50, %c0_51, %c0_52] : memref<2x32x32xbf16, #tpu.memory_space<vmem>>, vector<1x32x32xbf16>
    %151 = vector.shape_cast %150 : vector<1x32x32xbf16> to vector<32x32xbf16>
    %c1_53 = arith.constant 1 : index
    %c0_54 = arith.constant 0 : index
    %c0_55 = arith.constant 0 : index
    %152 = vector.load %arg5[%c1_53, %c0_54, %c0_55] : memref<2x32x64xbf16, #tpu.memory_space<vmem>>, vector<1x32x64xbf16>
    %153 = vector.shape_cast %152 : vector<1x32x64xbf16> to vector<32x64xbf16>
    %c1_56 = arith.constant 1 : index
    %c0_57 = arith.constant 0 : index
    %c0_58 = arith.constant 0 : index
    %154 = vector.load %arg6[%c1_56, %c0_57, %c0_58] : memref<2x64x32xbf16, #tpu.memory_space<vmem>>, vector<1x64x32xbf16>
    %155 = vector.shape_cast %154 : vector<1x64x32xbf16> to vector<64x32xbf16>
    %c1_59 = arith.constant 1 : index
    %c0_60 = arith.constant 0 : index
    %c0_61 = arith.constant 0 : index
    %156 = vector.load %arg7[%c1_59, %c0_60, %c0_61] : memref<2x8x128xf32, #tpu.memory_space<vmem>>, vector<1x8x128xf32>
    %157 = vector.shape_cast %156 : vector<1x8x128xf32> to vector<8x128xf32>
    %158 = vector.extract_strided_slice %157 {offsets = [0, 0], sizes = [1, 32], strides = [1, 1]} : vector<8x128xf32> to vector<1x32xf32>
    %159 = vector.extract_strided_slice %157 {offsets = [1, 0], sizes = [1, 32], strides = [1, 1]} : vector<8x128xf32> to vector<1x32xf32>
    %160 = vector.extract_strided_slice %157 {offsets = [2, 0], sizes = [1, 96], strides = [1, 1]} : vector<8x128xf32> to vector<1x96xf32>
    %161 = vector.extract_strided_slice %157 {offsets = [3, 0], sizes = [1, 32], strides = [1, 1]} : vector<8x128xf32> to vector<1x32xf32>
    %162 = vector.extract_strided_slice %157 {offsets = [4, 0], sizes = [1, 32], strides = [1, 1]} : vector<8x128xf32> to vector<1x32xf32>
    %163 = vector.extract_strided_slice %157 {offsets = [5, 0], sizes = [1, 32], strides = [1, 1]} : vector<8x128xf32> to vector<1x32xf32>
    %164 = vector.extract_strided_slice %157 {offsets = [6, 0], sizes = [1, 64], strides = [1, 1]} : vector<8x128xf32> to vector<1x64xf32>
    %165 = vector.extract_strided_slice %157 {offsets = [7, 0], sizes = [1, 32], strides = [1, 1]} : vector<8x128xf32> to vector<1x32xf32>
    %cst_62 = arith.constant dense<0.000000e+00> : vector<8xf32>
    %166 = vector.multi_reduction <add>, %147, %cst_62 [1] : vector<8x32xf32> to vector<8xf32>
    %167 = vector.shape_cast %166 : vector<8xf32> to vector<8x1xf32>
    %cst_63 = arith.constant 3.125000e-02 : f32
    %168 = vector.broadcast %cst_63 : f32 to vector<8x1xf32>
    %169 = arith.mulf %167, %168 : vector<8x1xf32>
    %170 = vector.broadcast %169 : vector<8x1xf32> to vector<8x32xf32>
    %171 = arith.subf %147, %170 : vector<8x32xf32>
    %172 = arith.mulf %171, %171 : vector<8x32xf32>
    %cst_64 = arith.constant dense<0.000000e+00> : vector<8xf32>
    %173 = vector.multi_reduction <add>, %172, %cst_64 [1] : vector<8x32xf32> to vector<8xf32>
    %174 = vector.shape_cast %173 : vector<8xf32> to vector<8x1xf32>
    %cst_65 = arith.constant 0.0322580636 : f32
    %175 = vector.broadcast %cst_65 : f32 to vector<8x1xf32>
    %176 = arith.mulf %174, %175 : vector<8x1xf32>
    %177 = math.sqrt %176 : vector<8x1xf32>
    %cst_66 = arith.constant 9.99999997E-7 : f32
    %178 = vector.broadcast %cst_66 : f32 to vector<8x1xf32>
    %179 = arith.addf %177, %178 : vector<8x1xf32>
    %180 = tpu.reciprocal %179 {approx = true} : vector<8x1xf32> -> vector<8x1xf32>
    %181 = vector.broadcast %169 : vector<8x1xf32> to vector<8x32xf32>
    %182 = arith.subf %147, %181 : vector<8x32xf32>
    %183 = vector.broadcast %158 : vector<1x32xf32> to vector<8x32xf32>
    %184 = arith.mulf %183, %182 : vector<8x32xf32>
    %185 = vector.broadcast %180 : vector<8x1xf32> to vector<8x32xf32>
    %186 = arith.mulf %184, %185 : vector<8x32xf32>
    %187 = vector.broadcast %159 : vector<1x32xf32> to vector<8x32xf32>
    %188 = arith.addf %186, %187 : vector<8x32xf32>
    %189 = arith.truncf %188 : vector<8x32xf32> to vector<8x32xbf16>
    %cst_67 = arith.constant dense<0.000000e+00> : vector<8x96xf32>
    %190 = tpu.matmul %189, %149, %cst_67 {dimension_numbers = #tpu.dot_dimension_numbers<[1], [0], [0], [1], [0, 0, 1, 1], [], []>} : vector<8x32xbf16>, vector<32x96xbf16>, vector<8x96xf32> -> vector<8x96xf32>
    %191 = vector.broadcast %160 : vector<1x96xf32> to vector<8x96xf32>
    %192 = arith.addf %190, %191 : vector<8x96xf32>
    %193 = vector.extract_strided_slice %192 {offsets = [0, 0], sizes = [8, 32], strides = [1, 1]} : vector<8x96xf32> to vector<8x32xf32>
    %194 = arith.truncf %193 : vector<8x32xf32> to vector<8x32xbf16>
    %195 = vector.extract_strided_slice %192 {offsets = [0, 32], sizes = [8, 32], strides = [1, 1]} : vector<8x96xf32> to vector<8x32xf32>
    %196 = arith.truncf %195 : vector<8x32xf32> to vector<8x32xbf16>
    %197 = vector.extract_strided_slice %192 {offsets = [0, 64], sizes = [8, 32], strides = [1, 1]} : vector<8x96xf32> to vector<8x32xf32>
    %198 = arith.truncf %197 : vector<8x32xf32> to vector<8x32xbf16>
    %199 = vector.extract_strided_slice %194 {offsets = [0, 0], sizes = [8, 8], strides = [1, 1]} : vector<8x32xbf16> to vector<8x8xbf16>
    %200 = vector.extract_strided_slice %196 {offsets = [0, 0], sizes = [8, 8], strides = [1, 1]} : vector<8x32xbf16> to vector<8x8xbf16>
    %201 = tpu.transpose %200, [1, 0] : vector<8x8xbf16> -> vector<8x8xbf16>
    %cst_68 = arith.constant dense<0.000000e+00> : vector<8x8xf32>
    %202 = tpu.matmul %199, %201, %cst_68 {dimension_numbers = #tpu.dot_dimension_numbers<[1], [0], [0], [1], [0, 0, 1, 1], [], []>} : vector<8x8xbf16>, vector<8x8xbf16>, vector<8x8xf32> -> vector<8x8xf32>
    %203 = vector.extract_strided_slice %194 {offsets = [0, 8], sizes = [8, 8], strides = [1, 1]} : vector<8x32xbf16> to vector<8x8xbf16>
    %204 = vector.extract_strided_slice %196 {offsets = [0, 8], sizes = [8, 8], strides = [1, 1]} : vector<8x32xbf16> to vector<8x8xbf16>
    %205 = tpu.transpose %204, [1, 0] : vector<8x8xbf16> -> vector<8x8xbf16>
    %cst_69 = arith.constant dense<0.000000e+00> : vector<8x8xf32>
    %206 = tpu.matmul %203, %205, %cst_69 {dimension_numbers = #tpu.dot_dimension_numbers<[1], [0], [0], [1], [0, 0, 1, 1], [], []>} : vector<8x8xbf16>, vector<8x8xbf16>, vector<8x8xf32> -> vector<8x8xf32>
    %207 = vector.extract_strided_slice %194 {offsets = [0, 16], sizes = [8, 8], strides = [1, 1]} : vector<8x32xbf16> to vector<8x8xbf16>
    %208 = vector.extract_strided_slice %196 {offsets = [0, 16], sizes = [8, 8], strides = [1, 1]} : vector<8x32xbf16> to vector<8x8xbf16>
    %209 = tpu.transpose %208, [1, 0] : vector<8x8xbf16> -> vector<8x8xbf16>
    %cst_70 = arith.constant dense<0.000000e+00> : vector<8x8xf32>
    %210 = tpu.matmul %207, %209, %cst_70 {dimension_numbers = #tpu.dot_dimension_numbers<[1], [0], [0], [1], [0, 0, 1, 1], [], []>} : vector<8x8xbf16>, vector<8x8xbf16>, vector<8x8xf32> -> vector<8x8xf32>
    %211 = vector.extract_strided_slice %194 {offsets = [0, 24], sizes = [8, 8], strides = [1, 1]} : vector<8x32xbf16> to vector<8x8xbf16>
    %212 = vector.extract_strided_slice %196 {offsets = [0, 24], sizes = [8, 8], strides = [1, 1]} : vector<8x32xbf16> to vector<8x8xbf16>
    %213 = tpu.transpose %212, [1, 0] : vector<8x8xbf16> -> vector<8x8xbf16>
    %cst_71 = arith.constant dense<0.000000e+00> : vector<8x8xf32>
    %214 = tpu.matmul %211, %213, %cst_71 {dimension_numbers = #tpu.dot_dimension_numbers<[1], [0], [0], [1], [0, 0, 1, 1], [], []>} : vector<8x8xbf16>, vector<8x8xbf16>, vector<8x8xf32> -> vector<8x8xf32>
    %215 = tpu.concatenate %202, %206, %210, %214 in 0 : vector<8x8xf32>, vector<8x8xf32>, vector<8x8xf32>, vector<8x8xf32> -> vector<32x8xf32>
    %cst_72 = arith.constant 0.353553385 : f32
    %216 = vector.broadcast %cst_72 : f32 to vector<32x8xf32>
    %217 = arith.mulf %215, %216 : vector<32x8xf32>
    %218 = arith.addf %217, %10 : vector<32x8xf32>
    %cst_73 = arith.constant dense<0xFF800000> : vector<32xf32>
    %219 = vector.multi_reduction <maximumf>, %218, %cst_73 [1] : vector<32x8xf32> to vector<32xf32>
    %220 = vector.shape_cast %219 : vector<32xf32> to vector<32x1xf32>
    %221 = vector.broadcast %220 : vector<32x1xf32> to vector<32x8xf32>
    %222 = arith.subf %218, %221 : vector<32x8xf32>
    %223 = math.exp %222 : vector<32x8xf32>
    %cst_74 = arith.constant dense<0.000000e+00> : vector<32xf32>
    %224 = vector.multi_reduction <add>, %223, %cst_74 [1] : vector<32x8xf32> to vector<32xf32>
    %225 = vector.shape_cast %224 : vector<32xf32> to vector<32x1xf32>
    %226 = tpu.reciprocal %225 {approx = true} : vector<32x1xf32> -> vector<32x1xf32>
    %227 = vector.broadcast %226 : vector<32x1xf32> to vector<32x8xf32>
    %228 = arith.mulf %223, %227 : vector<32x8xf32>
    %229 = vector.extract_strided_slice %228 {offsets = [0, 0], sizes = [8, 8], strides = [1, 1]} : vector<32x8xf32> to vector<8x8xf32>
    %230 = arith.truncf %229 : vector<8x8xf32> to vector<8x8xbf16>
    %231 = vector.extract_strided_slice %198 {offsets = [0, 0], sizes = [8, 8], strides = [1, 1]} : vector<8x32xbf16> to vector<8x8xbf16>
    %cst_75 = arith.constant dense<0.000000e+00> : vector<8x8xf32>
    %232 = tpu.matmul %230, %231, %cst_75 {dimension_numbers = #tpu.dot_dimension_numbers<[1], [0], [0], [1], [0, 0, 1, 1], [], []>} : vector<8x8xbf16>, vector<8x8xbf16>, vector<8x8xf32> -> vector<8x8xf32>
    %233 = vector.extract_strided_slice %228 {offsets = [8, 0], sizes = [8, 8], strides = [1, 1]} : vector<32x8xf32> to vector<8x8xf32>
    %234 = arith.truncf %233 : vector<8x8xf32> to vector<8x8xbf16>
    %235 = vector.extract_strided_slice %198 {offsets = [0, 8], sizes = [8, 8], strides = [1, 1]} : vector<8x32xbf16> to vector<8x8xbf16>
    %cst_76 = arith.constant dense<0.000000e+00> : vector<8x8xf32>
    %236 = tpu.matmul %234, %235, %cst_76 {dimension_numbers = #tpu.dot_dimension_numbers<[1], [0], [0], [1], [0, 0, 1, 1], [], []>} : vector<8x8xbf16>, vector<8x8xbf16>, vector<8x8xf32> -> vector<8x8xf32>
    %237 = vector.extract_strided_slice %228 {offsets = [16, 0], sizes = [8, 8], strides = [1, 1]} : vector<32x8xf32> to vector<8x8xf32>
    %238 = arith.truncf %237 : vector<8x8xf32> to vector<8x8xbf16>
    %239 = vector.extract_strided_slice %198 {offsets = [0, 16], sizes = [8, 8], strides = [1, 1]} : vector<8x32xbf16> to vector<8x8xbf16>
    %cst_77 = arith.constant dense<0.000000e+00> : vector<8x8xf32>
    %240 = tpu.matmul %238, %239, %cst_77 {dimension_numbers = #tpu.dot_dimension_numbers<[1], [0], [0], [1], [0, 0, 1, 1], [], []>} : vector<8x8xbf16>, vector<8x8xbf16>, vector<8x8xf32> -> vector<8x8xf32>
    %241 = vector.extract_strided_slice %228 {offsets = [24, 0], sizes = [8, 8], strides = [1, 1]} : vector<32x8xf32> to vector<8x8xf32>
    %242 = arith.truncf %241 : vector<8x8xf32> to vector<8x8xbf16>
    %243 = vector.extract_strided_slice %198 {offsets = [0, 24], sizes = [8, 8], strides = [1, 1]} : vector<8x32xbf16> to vector<8x8xbf16>
    %cst_78 = arith.constant dense<0.000000e+00> : vector<8x8xf32>
    %244 = tpu.matmul %242, %243, %cst_78 {dimension_numbers = #tpu.dot_dimension_numbers<[1], [0], [0], [1], [0, 0, 1, 1], [], []>} : vector<8x8xbf16>, vector<8x8xbf16>, vector<8x8xf32> -> vector<8x8xf32>
    %245 = tpu.concatenate %232, %236, %240, %244 in 1 : vector<8x8xf32>, vector<8x8xf32>, vector<8x8xf32>, vector<8x8xf32> -> vector<8x32xf32>
    %246 = arith.truncf %245 : vector<8x32xf32> to vector<8x32xbf16>
    %cst_79 = arith.constant dense<0.000000e+00> : vector<8x32xf32>
    %247 = tpu.matmul %246, %151, %cst_79 {dimension_numbers = #tpu.dot_dimension_numbers<[1], [0], [0], [1], [0, 0, 1, 1], [], []>} : vector<8x32xbf16>, vector<32x32xbf16>, vector<8x32xf32> -> vector<8x32xf32>
    %248 = vector.broadcast %161 : vector<1x32xf32> to vector<8x32xf32>
    %249 = arith.addf %247, %248 : vector<8x32xf32>
    %250 = arith.addf %147, %249 : vector<8x32xf32>
    %cst_80 = arith.constant dense<0.000000e+00> : vector<8xf32>
    %251 = vector.multi_reduction <add>, %250, %cst_80 [1] : vector<8x32xf32> to vector<8xf32>
    %252 = vector.shape_cast %251 : vector<8xf32> to vector<8x1xf32>
    %cst_81 = arith.constant 3.125000e-02 : f32
    %253 = vector.broadcast %cst_81 : f32 to vector<8x1xf32>
    %254 = arith.mulf %252, %253 : vector<8x1xf32>
    %255 = vector.broadcast %254 : vector<8x1xf32> to vector<8x32xf32>
    %256 = arith.subf %250, %255 : vector<8x32xf32>
    %257 = arith.mulf %256, %256 : vector<8x32xf32>
    %cst_82 = arith.constant dense<0.000000e+00> : vector<8xf32>
    %258 = vector.multi_reduction <add>, %257, %cst_82 [1] : vector<8x32xf32> to vector<8xf32>
    %259 = vector.shape_cast %258 : vector<8xf32> to vector<8x1xf32>
    %cst_83 = arith.constant 0.0322580636 : f32
    %260 = vector.broadcast %cst_83 : f32 to vector<8x1xf32>
    %261 = arith.mulf %259, %260 : vector<8x1xf32>
    %262 = math.sqrt %261 : vector<8x1xf32>
    %cst_84 = arith.constant 9.99999997E-7 : f32
    %263 = vector.broadcast %cst_84 : f32 to vector<8x1xf32>
    %264 = arith.addf %262, %263 : vector<8x1xf32>
    %265 = tpu.reciprocal %264 {approx = true} : vector<8x1xf32> -> vector<8x1xf32>
    %266 = vector.broadcast %254 : vector<8x1xf32> to vector<8x32xf32>
    %267 = arith.subf %250, %266 : vector<8x32xf32>
    %268 = vector.broadcast %162 : vector<1x32xf32> to vector<8x32xf32>
    %269 = arith.mulf %268, %267 : vector<8x32xf32>
    %270 = vector.broadcast %265 : vector<8x1xf32> to vector<8x32xf32>
    %271 = arith.mulf %269, %270 : vector<8x32xf32>
    %272 = vector.broadcast %163 : vector<1x32xf32> to vector<8x32xf32>
    %273 = arith.addf %271, %272 : vector<8x32xf32>
    %274 = arith.truncf %273 : vector<8x32xf32> to vector<8x32xbf16>
    %cst_85 = arith.constant dense<0.000000e+00> : vector<8x64xf32>
    %275 = tpu.matmul %274, %153, %cst_85 {dimension_numbers = #tpu.dot_dimension_numbers<[1], [0], [0], [1], [0, 0, 1, 1], [], []>} : vector<8x32xbf16>, vector<32x64xbf16>, vector<8x64xf32> -> vector<8x64xf32>
    %276 = vector.broadcast %164 : vector<1x64xf32> to vector<8x64xf32>
    %277 = arith.addf %275, %276 : vector<8x64xf32>
    %cst_86 = arith.constant 0.000000e+00 : f32
    %278 = vector.broadcast %cst_86 : f32 to vector<8x64xf32>
    %279 = arith.maximumf %277, %278 : vector<8x64xf32>
    %280 = arith.truncf %279 : vector<8x64xf32> to vector<8x64xbf16>
    %cst_87 = arith.constant dense<0.000000e+00> : vector<8x32xf32>
    %281 = tpu.matmul %280, %155, %cst_87 {dimension_numbers = #tpu.dot_dimension_numbers<[1], [0], [0], [1], [0, 0, 1, 1], [], []>} : vector<8x64xbf16>, vector<64x32xbf16>, vector<8x32xf32> -> vector<8x32xf32>
    %282 = arith.addf %250, %281 : vector<8x32xf32>
    %283 = vector.broadcast %165 : vector<1x32xf32> to vector<8x32xf32>
    %284 = arith.addf %282, %283 : vector<8x32xf32>
    %c0_88 = arith.constant 0 : index
    %c0_89 = arith.constant 0 : index
    %c0_90 = arith.constant 0 : index
    %285 = vector.load %arg8[%c0_88, %c0_89, %c0_90] : memref<1x8x32xf32, #tpu.memory_space<vmem>>, vector<1x8x32xf32>
    %286 = vector.shape_cast %285 : vector<1x8x32xf32> to vector<8x32xf32>
    %287 = vector.shape_cast %284 : vector<8x32xf32> to vector<1x8x32xf32>
    tpu.vector_store %arg8[%c0_88, %c0_89, %c0_90], %287 {strides = array<i32>} : memref<1x8x32xf32, #tpu.memory_space<vmem>>, vector<1x8x32xf32>,
    return
  }
  func.func @transform_0(%arg0: i32) -> (i32, i32, i32) {
    %c0_i32 = arith.constant 0 : i32
    %c0_i32_0 = arith.constant 0 : i32
    %c0_i32_1 = arith.constant 0 : i32
    return %arg0, %c0_i32, %c0_i32_0 : i32, i32, i32
  }
  func.func @transform_1(%arg0: i32) -> (i32, i32, i32) {
    %c0_i32 = arith.constant 0 : i32
    %c0_i32_0 = arith.constant 0 : i32
    %c0_i32_1 = arith.constant 0 : i32
    return %arg0, %c0_i32, %c0_i32_0 : i32, i32, i32
  }
  func.func @transform_2(%arg0: i32) -> (i32, i32, i32) {
    %c0_i32 = arith.constant 0 : i32
    %c0_i32_0 = arith.constant 0 : i32
    %c0_i32_1 = arith.constant 0 : i32
    %c0_i32_2 = arith.constant 0 : i32
    return %c0_i32, %c0_i32_0, %c0_i32_1 : i32, i32, i32
  }
  func.func @transform_3(%arg0: i32) -> (i32, i32, i32) {
    %c0_i32 = arith.constant 0 : i32
    %c0_i32_0 = arith.constant 0 : i32
    %c0_i32_1 = arith.constant 0 : i32
    %c0_i32_2 = arith.constant 0 : i32
    return %c0_i32, %c0_i32_0, %c0_i32_1 : i32, i32, i32
  }
  func.func @transform_4(%arg0: i32) -> (i32, i32, i32) {
    %c0_i32 = arith.constant 0 : i32
    %c0_i32_0 = arith.constant 0 : i32
    %c0_i32_1 = arith.constant 0 : i32
    %c0_i32_2 = arith.constant 0 : i32
    return %c0_i32, %c0_i32_0, %c0_i32_1 : i32, i32, i32
  }
  func.func @transform_5(%arg0: i32) -> (i32, i32, i32) {
    %c0_i32 = arith.constant 0 : i32
    %c0_i32_0 = arith.constant 0 : i32
    %c0_i32_1 = arith.constant 0 : i32
    %c0_i32_2 = arith.constant 0 : i32
    return %c0_i32, %c0_i32_0, %c0_i32_1 : i32, i32, i32
  }
  func.func @transform_6(%arg0: i32) -> (i32, i32, i32) {
    %c0_i32 = arith.constant 0 : i32
    %c0_i32_0 = arith.constant 0 : i32
    %c0_i32_1 = arith.constant 0 : i32
    %c0_i32_2 = arith.constant 0 : i32
    return %c0_i32, %c0_i32_0, %c0_i32_1 : i32, i32, i32
  }
  func.func @transform_7(%arg0: i32) -> (i32, i32, i32) {
    %c0_i32 = arith.constant 0 : i32
    %c0_i32_0 = arith.constant 0 : i32
    %c0_i32_1 = arith.constant 0 : i32
    return %arg0, %c0_i32, %c0_i32_0 : i32, i32, i32
  }
}

</mosaic_0001>

<llo_original>
// kernel: tpu_custom_call.1
$region0: #{tpu_custom_call.1}
  #allocation0 [shape = 'u32[]', space=smem, size = 0x4, offset = 0x4, fixed_abs, tag = 'smem constant byte address 0x4 - core index']
  #allocation1 [shape = 'u32[72,128]{1,0:T(1,128)}', space=vmem, size = 0x9000, scoped, tag = 'internal scratch']
  %s0 = inlined_call_operand.hbm [shape: f32[2,8,32], index: 0, kind: input, shape index: {}]
  %s1 = inlined_call_operand.hbm [shape: f32[2,1,8], index: 1, kind: input, shape index: {}]
  %s2 = inlined_call_operand.vmem [shape: bf16[2,32,96], index: 2, kind: input, shape index: {}]
  %s3 = inlined_call_operand.vmem [shape: bf16[2,32,32], index: 3, kind: input, shape index: {}]
  %s4 = inlined_call_operand.vmem [shape: bf16[2,32,64], index: 4, kind: input, shape index: {}]
  %s5 = inlined_call_operand.vmem [shape: bf16[2,64,32], index: 5, kind: input, shape index: {}]
  %s6 = inlined_call_operand.hbm [shape: f32[2,8,128], index: 6, kind: input, shape index: {}]
  %s7 = inlined_call_operand.hbm [shape: f32[2,8,32], index: 7, kind: output, shape index: {}]
  %s8 = sld [smem:[#allocation0]]
  $region73: #{tpu_custom_call.1} parent=0
    _
  %s10 = ssub.s32 1, %s8
  %s11 = scalar_select 0, %s10, %s8
  $region1: #{tpu_custom_call.1} parent=0
    #allocation2 [shape = 'u8[8192]{0}', space=vmem, size = 0x2000, scoped, tag = 'input window, operand 0']
    #allocation3 [shape = 's32[2]{0}', space=sflag, size = 0x8, scoped, tag = 'scoped memory for tpu_custom_call.1']
    #allocation4 [shape = 's32[2]{0}', space=sflag, size = 0x8, scoped, tag = 'scoped memory for tpu_custom_call.1']
    #allocation5 [shape = 'u8[1024]{0}', space=vmem, size = 0x400, scoped, tag = 'input window, operand 1']
    #allocation6 [shape = 's32[2]{0}', space=sflag, size = 0x8, scoped, tag = 'scoped memory for tpu_custom_call.1']
    #allocation7 [shape = 'u8[8192]{0}', space=vmem, size = 0x2000, scoped, tag = 'input window, operand 6, single buffered']
    #allocation8 [shape = 'u8[8192]{0}', space=vmem, size = 0x2000, scoped, tag = 'output window, operand 0']
    %12 = vsyncpa [#allocation3], 0
    %s13 = scalar_lea.sflag [#allocation3], 1
    %14 = vsyncpa %s13, 0
    %15 = vsyncpa [#allocation6], 0
    %s16 = scalar_lea.sflag [#allocation6], 1
    %17 = vsyncpa %s16, 0
    %18 = vsyncpa [#allocation4], 0
    %s19 = scalar_lea.sflag [#allocation4], 1
    %20 = vsyncpa %s19, 0
    loop: start=0, step=1, limit=4
    $region2: #{tpu_custom_call.1} parent=1 // loop_pre_header
      _
    $region3: #{tpu_custom_call.1} parent=1 // loop_header
      %s22 = sphi 0, %s26
      %p23 = scmp.ge.s32.totalorder %s22, 4
      %s32 = sphi 0, %s34
      %s35 = sphi 0, %s32
      %s36 = sphi 0, %s35
      %s52 = sphi 0, %s36
      %s58 = sphi 0, %s60
      %s61 = sphi 0, %s58
      %s62 = sphi 0, %s61
      %s78 = sphi 0, %s62
      %s82 = sphi 0, %s82
      %s84 = sphi 0, %s82
      %s85 = sphi 0, %s84
      %s99 = sphi 0, %s85
      %s103 = sphi 0, %s103
      %s105 = sphi 0, %s103
      %s106 = sphi 0, %s105
      %s120 = sphi 0, %s106
      %s124 = sphi 0, %s124
      %s126 = sphi 0, %s124
      %s127 = sphi 0, %s126
      %s141 = sphi 0, %s127
      %s145 = sphi 0, %s145
      %s147 = sphi 0, %s145
      %s148 = sphi 0, %s147
      %s162 = sphi 0, %s148
      %s166 = sphi 0, %s166
      %s168 = sphi 0, %s166
      %s169 = sphi 0, %s168
      %s183 = sphi 0, %s169
      %s189 = sphi 0, %s191
      %s192 = sphi 0, %s189
      %s193 = sphi 0, %s192
      %s209 = sphi 0, %s193
    $region4: #{tpu_custom_call.1} parent=1 // loop_header_branch
      %25 = sbr.rel (%p23) target = $region8
    $region5: #{tpu_custom_call.1} parent=1 // loop_body
      %s27 = ssub.s32 %s22, 1
      %s28 = ssub.s32 %s22, 2
      %s29 = sadd.s32 %s22, 1
      %s30 = ssub.s32 %s22, %s29
      %p31 = scmp.eq.s32.totalorder %s30, 0
      %s33 = sadd.s32 %s32, 1
      %s34 = scalar_select %p31, %s32, %s33
      %p37 = pneg %p31
      %p38 = scmp.eq.s32.totalorder %s22, 1
      %p39 = por %p37, %p38
      %p40 = scmp.ne.s32.totalorder %s32, %s35
      %p41 = scmp.eq.s32.totalorder %s22, 0
      %p42 = por %p40, %p41
      %p43 = scmp.ne.s32.totalorder %s32, %s35
      %p44 = scmp.eq.s32.totalorder %s27, 1
      %p45 = por %p43, %p44
      %p46 = scmp.ne.s32.totalorder %s35, %s36
      %p47 = scmp.eq.s32.totalorder %s27, 0
      %p48 = por %p46, %p47
      %p49 = scmp.ne.s32.totalorder %s35, %s36
      %p50 = scmp.eq.s32.totalorder %s28, 1
      %p51 = por %p49, %p50
      %p53 = scmp.ne.s32.totalorder %s36, %s52
      %p54 = scmp.eq.s32.totalorder %s28, 0
      %p55 = por %p53, %p54
      %s56 = ssub.s32 %s22, %s29
      %p57 = scmp.eq.s32.totalorder %s56, 0
      %s59 = sadd.s32 %s58, 1
      %s60 = scalar_select %p57, %s58, %s59
      %p63 = pneg %p57
      %p64 = scmp.eq.s32.totalorder %s22, 1
      %p65 = por %p63, %p64
      %p66 = scmp.ne.s32.totalorder %s58, %s61
      %p67 = scmp.eq.s32.totalorder %s22, 0
      %p68 = por %p66, %p67
      %p69 = scmp.ne.s32.totalorder %s58, %s61
      %p70 = scmp.eq.s32.totalorder %s27, 1
      %p71 = por %p69, %p70
      %p72 = scmp.ne.s32.totalorder %s61, %s62
      %p73 = scmp.eq.s32.totalorder %s27, 0
      %p74 = por %p72, %p73
      %p75 = scmp.ne.s32.totalorder %s61, %s62
      %p76 = scmp.eq.s32.totalorder %s28, 1
      %p77 = por %p75, %p76
      %p79 = scmp.ne.s32.totalorder %s62, %s78
      %p80 = scmp.eq.s32.totalorder %s28, 0
      %p81 = por %p79, %p80
      %s83 = sadd.s32 %s82, 1
      %p86 = scmp.eq.s32.totalorder %s22, 1
      %p87 = scmp.ne.s32.totalorder %s82, %s84
      %p88 = scmp.eq.s32.totalorder %s22, 0
      %p89 = por %p87, %p88
      %p90 = scmp.ne.s32.totalorder %s82, %s84
      %p91 = scmp.eq.s32.totalorder %s27, 1
      %p92 = por %p90, %p91
      %p93 = scmp.ne.s32.totalorder %s84, %s85
      %p94 = scmp.eq.s32.totalorder %s27, 0
      %p95 = por %p93, %p94
      %p96 = scmp.ne.s32.totalorder %s84, %s85
      %p97 = scmp.eq.s32.totalorder %s28, 1
      %p98 = por %p96, %p97
      %p100 = scmp.ne.s32.totalorder %s85, %s99
      %p101 = scmp.eq.s32.totalorder %s28, 0
      %p102 = por %p100, %p101
      %s104 = sadd.s32 %s103, 1
      %p107 = scmp.eq.s32.totalorder %s22, 1
      %p108 = scmp.ne.s32.totalorder %s103, %s105
      %p109 = scmp.eq.s32.totalorder %s22, 0
      %p110 = por %p108, %p109
      %p111 = scmp.ne.s32.totalorder %s103, %s105
      %p112 = scmp.eq.s32.totalorder %s27, 1
      %p113 = por %p111, %p112
      %p114 = scmp.ne.s32.totalorder %s105, %s106
      %p115 = scmp.eq.s32.totalorder %s27, 0
      %p116 = por %p114, %p115
      %p117 = scmp.ne.s32.totalorder %s105, %s106
      %p118 = scmp.eq.s32.totalorder %s28, 1
      %p119 = por %p117, %p118
      %p121 = scmp.ne.s32.totalorder %s106, %s120
      %p122 = scmp.eq.s32.totalorder %s28, 0
      %p123 = por %p121, %p122
      %s125 = sadd.s32 %s124, 1
      %p128 = scmp.eq.s32.totalorder %s22, 1
      %p129 = scmp.ne.s32.totalorder %s124, %s126
      %p130 = scmp.eq.s32.totalorder %s22, 0
      %p131 = por %p129, %p130
      %p132 = scmp.ne.s32.totalorder %s124, %s126
      %p133 = scmp.eq.s32.totalorder %s27, 1
      %p134 = por %p132, %p133
      %p135 = scmp.ne.s32.totalorder %s126, %s127
      %p136 = scmp.eq.s32.totalorder %s27, 0
      %p137 = por %p135, %p136
      %p138 = scmp.ne.s32.totalorder %s126, %s127
      %p139 = scmp.eq.s32.totalorder %s28, 1
      %p140 = por %p138, %p139
      %p142 = scmp.ne.s32.totalorder %s127, %s141
      %p143 = scmp.eq.s32.totalorder %s28, 0
      %p144 = por %p142, %p143
      %s146 = sadd.s32 %s145, 1
      %p149 = scmp.eq.s32.totalorder %s22, 1
      %p150 = scmp.ne.s32.totalorder %s145, %s147
      %p151 = scmp.eq.s32.totalorder %s22, 0
      %p152 = por %p150, %p151
      %p153 = scmp.ne.s32.totalorder %s145, %s147
      %p154 = scmp.eq.s32.totalorder %s27, 1
      %p155 = por %p153, %p154
      %p156 = scmp.ne.s32.totalorder %s147, %s148
      %p157 = scmp.eq.s32.totalorder %s27, 0
      %p158 = por %p156, %p157
      %p159 = scmp.ne.s32.totalorder %s147, %s148
      %p160 = scmp.eq.s32.totalorder %s28, 1
      %p161 = por %p159, %p160
      %p163 = scmp.ne.s32.totalorder %s148, %s162
      %p164 = scmp.eq.s32.totalorder %s28, 0
      %p165 = por %p163, %p164
      %s167 = sadd.s32 %s166, 1
      %p170 = scmp.eq.s32.totalorder %s22, 1
      %p171 = scmp.ne.s32.totalorder %s166, %s168
      %p172 = scmp.eq.s32.totalorder %s22, 0
      %p173 = por %p171, %p172
      %p174 = scmp.ne.s32.totalorder %s166, %s168
      %p175 = scmp.eq.s32.totalorder %s27, 1
      %p176 = por %p174, %p175
      %p177 = scmp.ne.s32.totalorder %s168, %s169
      %p178 = scmp.eq.s32.totalorder %s27, 0
      %p179 = por %p177, %p178
      %p180 = scmp.ne.s32.totalorder %s168, %s169
      %p181 = scmp.eq.s32.totalorder %s28, 1
      %p182 = por %p180, %p181
      %p184 = scmp.ne.s32.totalorder %s169, %s183
      %p185 = scmp.eq.s32.totalorder %s28, 0
      %p186 = por %p184, %p185
      %s187 = ssub.s32 %s22, %s29
      %p188 = scmp.eq.s32.totalorder %s187, 0
      %s190 = sadd.s32 %s189, 1
      %s191 = scalar_select %p188, %s189, %s190
      %p194 = pneg %p188
      %p195 = scmp.eq.s32.totalorder %s22, 1
      %p196 = por %p194, %p195
      %p197 = scmp.ne.s32.totalorder %s189, %s192
      %p198 = scmp.eq.s32.totalorder %s22, 0
      %p199 = por %p197, %p198
      %p200 = scmp.ne.s32.totalorder %s189, %s192
      %p201 = scmp.eq.s32.totalorder %s27, 1
      %p202 = por %p200, %p201
      %p203 = scmp.ne.s32.totalorder %s192, %s193
      %p204 = scmp.eq.s32.totalorder %s27, 0
      %p205 = por %p203, %p204
      %p206 = scmp.ne.s32.totalorder %s192, %s193
      %p207 = scmp.eq.s32.totalorder %s28, 1
      %p208 = por %p206, %p207
      %p210 = scmp.ne.s32.totalorder %s193, %s209
      %p211 = scmp.eq.s32.totalorder %s28, 0
      %p212 = por %p210, %p211
      %p213 = scmp.le.s32.totalorder 1, %s22
      %p214 = scmp.lt.s32.totalorder %s22, 3
      %p215 = pnand %p213, %p214
      %p216 = pneg %p215
      // Predicated region
      $region9: #{tpu_custom_call.1} parent=5 // pred_check
        _
      $region10: #{tpu_custom_call.1} parent=5 // pred_check_branch
        %218 = sbr.rel (%p215) target = $region12
      $region11: #{tpu_custom_call.1} parent=5 // pred_region
        %s219 = ssub.s32 %s22, 1
        // Predicated region
        $region13: #{tpu_custom_call.1} parent=11 // pred_check
          %p220 = pneg %p95
        $region14: #{tpu_custom_call.1} parent=11 // pred_check_branch
          %222 = sbr.rel (%p220) target = $region16
        $region15: #{tpu_custom_call.1} parent=11 // pred_region
          _
        $region16: #{tpu_custom_call.1} parent=11 // pred_fallthru
          _
        // Predicated region
        $region17: #{tpu_custom_call.1} parent=11 // pred_check
          %p223 = pneg %p116
        $region18: #{tpu_custom_call.1} parent=11 // pred_check_branch
          %225 = sbr.rel (%p223) target = $region20
        $region19: #{tpu_custom_call.1} parent=11 // pred_region
          _
        $region20: #{tpu_custom_call.1} parent=11 // pred_fallthru
          _
        // Predicated region
        $region21: #{tpu_custom_call.1} parent=11 // pred_check
          %p226 = pneg %p137
        $region22: #{tpu_custom_call.1} parent=11 // pred_check_branch
          %228 = sbr.rel (%p226) target = $region24
        $region23: #{tpu_custom_call.1} parent=11 // pred_region
          _
        $region24: #{tpu_custom_call.1} parent=11 // pred_fallthru
          _
        // Predicated region
        $region25: #{tpu_custom_call.1} parent=11 // pred_check
          %p229 = pneg %p158
        $region26: #{tpu_custom_call.1} parent=11 // pred_check_branch
          %231 = sbr.rel (%p229) target = $region28
        $region27: #{tpu_custom_call.1} parent=11 // pred_region
          _
        $region28: #{tpu_custom_call.1} parent=11 // pred_fallthru
          _
        // Predicated region
        $region29: #{tpu_custom_call.1} parent=11 // pred_check
          %p232 = pneg %p179
        $region30: #{tpu_custom_call.1} parent=11 // pred_check_branch
          %234 = sbr.rel (%p232) target = $region32
        $region31: #{tpu_custom_call.1} parent=11 // pred_region
          %236 = vsyncadd [#allocation6], 0
          %s237 = sshll.u32 %s6, 4
          %s238 = int_to_ptr.hbm [resolvable:$true] %s237
          %s239 = sshll.u32 [#allocation7], 4
          %s240 = int_to_ptr.vmem [resolvable:$true] %s239
          %245 = dma.hbm_to_vmem [thread:$0]  %s238, 256, %s240, [#allocation6], 128, 128, 8
        $region32: #{tpu_custom_call.1} parent=11 // pred_fallthru
          _
      $region12: #{tpu_custom_call.1} parent=5 // pred_fallthru
        _
      %p246 = scmp.lt.s32.totalorder %s22, 2
      // Predicated region
      $region33: #{tpu_custom_call.1} parent=5 // pred_check
        %p247 = pneg %p246
      $region34: #{tpu_custom_call.1} parent=5 // pred_check_branch
        %249 = sbr.rel (%p247) target = $region36
      $region35: #{tpu_custom_call.1} parent=5 // pred_region
        // Predicated region
        $region37: #{tpu_custom_call.1} parent=35 // pred_check
          %p250 = pneg %p42
        $region38: #{tpu_custom_call.1} parent=35 // pred_check_branch
          %252 = sbr.rel (%p250) target = $region40
        $region39: #{tpu_custom_call.1} parent=35 // pred_region
          %s253 = sand.u32 %s32, 1
          %s254 = scalar_lea.sflag [#allocation3], %s253
          %s255 = sand.u32 %s32, 1
          %s256 = smul.addr %s255, 8
          %s257 = scalar_lea.vmem [#allocation2], %s256
          %259 = vsyncadd %s254, 0
          %s260 = smul.addr %s22, 8
          %s261 = scalar_lea.hbm %s0, %s260
          %s263 = sshll.u32 %s261, 4
          %s264 = int_to_ptr.hbm [resolvable:$true] %s263
          %s265 = sshll.u32 %s257, 4
          %s266 = int_to_ptr.vmem [resolvable:$true] %s265
          %268 = dma.hbm_to_vmem [thread:$0]  %s264, 128, %s266, %s254
        $region40: #{tpu_custom_call.1} parent=35 // pred_fallthru
          _
        // Predicated region
        $region41: #{tpu_custom_call.1} parent=35 // pred_check
          %p269 = pneg %p68
        $region42: #{tpu_custom_call.1} parent=35 // pred_check_branch
          %271 = sbr.rel (%p269) target = $region44
        $region43: #{tpu_custom_call.1} parent=35 // pred_region
          %s272 = sand.u32 %s22, 1
          %s273 = scalar_lea.sflag [#allocation6], %s272
          %s274 = sand.u32 %s58, 1
          %s275 = scalar_lea.vmem [#allocation5], %s274
          %277 = vsyncadd %s273, 0
          %s278 = scalar_lea.hbm %s1, %s22
          %s280 = sshll.u32 %s278, 4
          %s281 = int_to_ptr.hbm [resolvable:$true] %s280
          %s282 = sshll.u32 %s275, 4
          %s283 = int_to_ptr.vmem [resolvable:$true] %s282
          %285 = dma.hbm_to_vmem [thread:$0]  %s281, 16, %s283, %s273
        $region44: #{tpu_custom_call.1} parent=35 // pred_fallthru
          _
      $region36: #{tpu_custom_call.1} parent=5 // pred_fallthru
        _
      %p286 = scmp.le.s32.totalorder 1, %s22
      %p287 = scmp.lt.s32.totalorder %s22, 3
      %p288 = pnand %p286, %p287
      %p289 = pneg %p288
      // Predicated region
      $region45: #{tpu_custom_call.1} parent=5 // pred_check
        _
      $region46: #{tpu_custom_call.1} parent=5 // pred_check_branch
        %291 = sbr.rel (%p288) target = $region48
      $region47: #{tpu_custom_call.1} parent=5 // pred_region
        %s292 = ssub.s32 %s22, 1
        %s293 = sand.u32 %s35, 1
        %s294 = scalar_lea.sflag [#allocation3], %s293
        %s295 = sand.u32 %s35, 1
        %s296 = smul.addr %s295, 8
        %s297 = scalar_lea.vmem [#allocation2], %s296
        // Predicated region
        $region49: #{tpu_custom_call.1} parent=47 // pred_check
          %p298 = pneg %p48
        $region50: #{tpu_custom_call.1} parent=47 // pred_check_branch
          %300 = sbr.rel (%p298) target = $region52
        $region51: #{tpu_custom_call.1} parent=47 // pred_region
          %302 = dma.done %s294, 128
        $region52: #{tpu_custom_call.1} parent=47 // pred_fallthru
          _
        %s303 = sand.u32 %s27, 1
        %s304 = scalar_lea.sflag [#allocation6], %s303
        %s305 = sand.u32 %s61, 1
        %s306 = scalar_lea.vmem [#allocation5], %s305
        // Predicated region
        $region53: #{tpu_custom_call.1} parent=47 // pred_check
          %p307 = pneg %p74
        $region54: #{tpu_custom_call.1} parent=47 // pred_check_branch
          %309 = sbr.rel (%p307) target = $region56
        $region55: #{tpu_custom_call.1} parent=47 // pred_region
          %311 = dma.done %s304, 16
        $region56: #{tpu_custom_call.1} parent=47 // pred_fallthru
          _
        // Predicated region
        $region57: #{tpu_custom_call.1} parent=47 // pred_check
          %p312 = pneg %p179
        $region58: #{tpu_custom_call.1} parent=47 // pred_check_branch
          %314 = sbr.rel (%p312) target = $region60
        $region59: #{tpu_custom_call.1} parent=47 // pred_region
          %316 = dma.done [#allocation6], 256
        $region60: #{tpu_custom_call.1} parent=47 // pred_fallthru
          _
        %s317 = sand.u32 %s35, 1
        %s318 = scalar_lea.sflag [#allocation3], %s317
        %s319 = sand.u32 %s35, 1
        %s320 = smul.addr %s319, 8
        %s321 = scalar_lea.vmem [#allocation2], %s320
        %p322 = pneg %p48
        %p323 = pneg %p45
        %s324 = sand.u32 %s27, 1
        %s325 = scalar_lea.sflag [#allocation6], %s324
        %s326 = sand.u32 %s61, 1
        %s327 = scalar_lea.vmem [#allocation5], %s326
        %p328 = pneg %p74
        %p329 = pneg %p71
        %p330 = pneg %p95
        %p331 = pneg %p92
        %p332 = pneg %p116
        %p333 = pneg %p113
        %p334 = pneg %p137
        %p335 = pneg %p134
        %p336 = pneg %p158
        %p337 = pneg %p155
        %p338 = pneg %p179
        %p339 = pneg %p176
        %p340 = pneg %p205
        %p341 = pneg %p202
        %s342 = sand.u32 %s192, 1
        %s343 = scalar_lea.sflag [#allocation4], %s342
        %s344 = sand.u32 %s192, 1
        %s345 = smul.addr %s344, 8
        %s346 = scalar_lea.vmem [#allocation8], %s345
        %v348 = vld [vmem:[%s297] sm:$0xff]
        %v349 = vld [vmem:[%s306] sm:$0x1]
        %vm350 = vcmp.eq.f32.partialorder %v349, 0.0
        %v351 = vsel %vm350, -1e+09, 0.0
        %v353 = vperm.slane %v351, 0
        %v355 = vld [vmem:[%s2] sm:$0xf]
        %v356 = vld [vmem:[%s2 + $0x4] sm:$0xf]
        %v357 = vld [vmem:[%s2 + $0x8] sm:$0xf]
        %v358 = vld [vmem:[%s2 + $0xc] sm:$0xf]
        %v359 = vld [vmem:[%s3] sm:$0xf]
        %v360 = vld [vmem:[%s3 + $0x4] sm:$0xf]
        %v361 = vld [vmem:[%s3 + $0x8] sm:$0xf]
        %v362 = vld [vmem:[%s3 + $0xc] sm:$0xf]
        %v363 = vld [vmem:[%s4] sm:$0xf]
        %v364 = vld [vmem:[%s4 + $0x4] sm:$0xf]
        %v365 = vld [vmem:[%s4 + $0x8] sm:$0xf]
        %v366 = vld [vmem:[%s4 + $0xc] sm:$0xf]
        %v367 = vld [vmem:[%s5] sm:$0xf]
        %v368 = vld [vmem:[%s5 + $0x4] sm:$0xf]
        %v369 = vld [vmem:[%s5 + $0x8] sm:$0xf]
        %v370 = vld [vmem:[%s5 + $0xc] sm:$0xf]
        %v371 = vld [vmem:[%s5 + $0x10] sm:$0xf]
        %v372 = vld [vmem:[%s5 + $0x14] sm:$0xf]
        %v373 = vld [vmem:[%s5 + $0x18] sm:$0xf]
        %v374 = vld [vmem:[%s5 + $0x1c] sm:$0xf]
        %v375 = vld [vmem:[#allocation7] sm:$0xff]
        %vm376 = vcmask 261120
        %v377 = vsel %vm376, %v348, 0.0
        %378 = vadd.xlane.f32.xlu0 %v377
        %v379 = vpop.xlane.xlu0 %378
        %v380 = vmul.f32 %v379, 0.03125
        %v381 = vsub.f32 %v348, %v380
        %v382 = vmul.f32 %v381, %v381
        %v383 = vsel %vm376, %v382, 0.0
        %384 = vadd.xlane.f32.xlu0 %v383
        %v385 = vpop.xlane.xlu0 %384
        %v386 = vmul.f32 %v385, 0.032258064
        %v387 = vrsqrt.pop %v386
        %v388 = vmul.f32 %v387, %v386
        %v389 = vmul.f32 %v388, %v387
        %v390 = vmul.f32 0.5, %v389
        %v391 = vsub.f32 1.5, %v390
        %v392 = vmul.f32 %v387, %v391
        %v393 = vmul.f32 %v386, %v392
        %vm394 = vcmp.eq.f32.partialorder %v386, inf
        %v395 = vsel %vm394, %v386, %v393
        %vm396 = vcmp.eq.f32.partialorder %v386, 0.0
        %v397 = vand.u32 %v386, 2147483648
        %v398 = vsel %vm396, %v397, %v395
        %v399 = vadd.f32 %v398, 1e-06
        %v400 = vrcp.pop %v399
        %v401 = vperm.slane %v375, 0
        %v402 = vmul.f32 %v401, %v381
        %v403 = vmul.f32 %v402, %v400
        %v404 = vperm.slane %v375, 1
        %v405 = vadd.f32 %v403, %v404
        %v406 = vpack.c.bf16 %v405, %v405
        %v407 = vperm.slane %v375, 2
        %v412 = vunpack.c.l.b16 %v355
        %v413 = vunpack.c.l.b16 %v356
        %v414 = vunpack.c.l.b16 %v357
        %v415 = vunpack.c.l.b16 %v358
        %v416 = vpack.c.b16 %v413, %v412
        %v417 = vpack.c.b16 %v415, %v414
        %v421 = vsel %vm376, %v406, 0
        %423 = vmatpush.bf16.msra.mxu0 0
        %424 = vmatpush.bf16.msra.mxu0 0
        %425 = vmatpush.bf16.msra.mxu0 0
        %426 = vmatpush.bf16.msra.mxu0 0
        %427 = vmatpush.bf16.msra.mxu0 0
        %428 = vmatpush.bf16.msra.mxu0 0
        %429 = vmatpush.bf16.msra.mxu0 %v417
        %430 = vmatpush.bf16.msra.mxu0 %v416
        %431 = vmatmul.bf16.gmra.mxu0 %v421
        %v432 = vpop.f32.mrf.mxu0
        %v433 = vadd.f32 %v407, %v432
        %v434 = vpop.f32.mrf.mxu0
        %435 = vdwg.mxu0
        %v436 = vpack.c.bf16 %v433, %v433
        %v438 = vunpack.c.l.b16 %v436
        %v439 = vpack.c.b16 %v438, %v438
        %440 = vrot.lane.b32.xlu0 %v439, 96
        %v441 = vpop.permute.xlu0 %440
        %vm442 = vcmask 64512
        %v444 = vsel %vm442, %v436, 0
        %v447 = vsel %vm442, %v441, 0
        %449 = vmatpush.bf16.xpose.msra.mxu0 0
        %450 = vmatpush.bf16.xpose.msra.mxu0 0
        %451 = vmatpush.bf16.xpose.msra.mxu0 0
        %452 = vmatpush.bf16.xpose.msra.mxu0 0
        %453 = vmatpush.bf16.xpose.msra.mxu0 0
        %454 = vmatpush.bf16.xpose.msra.mxu0 0
        %455 = vmatpush.bf16.xpose.msra.mxu0 0
        %456 = vmatpush.bf16.xpose.msra.mxu0 %v447
        %457 = vmatmul.bf16.gmra.mxu0 %v444
        %v458 = vpop.f32.mrf.mxu0
        %v459 = vadd.f32 0.0, %v458
        %v460 = vpop.f32.mrf.mxu0
        %461 = vdwg.mxu0
        %462 = vrot.lane.b32.xlu0 %v439, 120
        %v463 = vpop.permute.xlu0 %462
        %464 = vrot.lane.b32.xlu0 %v439, 88
        %v465 = vpop.permute.xlu0 %464
        %v467 = vsel %vm442, %v463, 0
        %v470 = vsel %vm442, %v465, 0
        %472 = vmatpush.bf16.xpose.msra.mxu0 0
        %473 = vmatpush.bf16.xpose.msra.mxu0 0
        %474 = vmatpush.bf16.xpose.msra.mxu0 0
        %475 = vmatpush.bf16.xpose.msra.mxu0 0
        %476 = vmatpush.bf16.xpose.msra.mxu0 0
        %477 = vmatpush.bf16.xpose.msra.mxu0 0
        %478 = vmatpush.bf16.xpose.msra.mxu0 0
        %479 = vmatpush.bf16.xpose.msra.mxu0 %v470
        %480 = vmatmul.bf16.gmra.mxu0 %v467
        %v481 = vpop.f32.mrf.mxu0
        %v482 = vadd.f32 0.0, %v481
        %v483 = vpop.f32.mrf.mxu0
        %484 = vdwg.mxu0
        %485 = vrot.lane.b32.xlu0 %v439, 112
        %v486 = vpop.permute.xlu0 %485
        %487 = vrot.lane.b32.xlu0 %v439, 80
        %v488 = vpop.permute.xlu0 %487
        %v490 = vsel %vm442, %v486, 0
        %v493 = vsel %vm442, %v488, 0
        %495 = vmatpush.bf16.xpose.msra.mxu0 0
        %496 = vmatpush.bf16.xpose.msra.mxu0 0
        %497 = vmatpush.bf16.xpose.msra.mxu0 0
        %498 = vmatpush.bf16.xpose.msra.mxu0 0
        %499 = vmatpush.bf16.xpose.msra.mxu0 0
        %500 = vmatpush.bf16.xpose.msra.mxu0 0
        %501 = vmatpush.bf16.xpose.msra.mxu0 0
        %502 = vmatpush.bf16.xpose.msra.mxu0 %v493
        %503 = vmatmul.bf16.gmra.mxu0 %v490
        %v504 = vpop.f32.mrf.mxu0
        %v505 = vadd.f32 0.0, %v504
        %v506 = vpop.f32.mrf.mxu0
        %507 = vdwg.mxu0
        %508 = vrot.lane.b32.xlu0 %v439, 104
        %v509 = vpop.permute.xlu0 %508
        %510 = vrot.lane.b32.xlu0 %v439, 72
        %v511 = vpop.permute.xlu0 %510
        %v513 = vsel %vm442, %v509, 0
        %v516 = vsel %vm442, %v511, 0
        %518 = vmatpush.bf16.xpose.msra.mxu0 0
        %519 = vmatpush.bf16.xpose.msra.mxu0 0
        %520 = vmatpush.bf16.xpose.msra.mxu0 0
        %521 = vmatpush.bf16.xpose.msra.mxu0 0
        %522 = vmatpush.bf16.xpose.msra.mxu0 0
        %523 = vmatpush.bf16.xpose.msra.mxu0 0
        %524 = vmatpush.bf16.xpose.msra.mxu0 0
        %525 = vmatpush.bf16.xpose.msra.mxu0 %v516
        %526 = vmatmul.bf16.gmra.mxu0 %v513
        %v527 = vpop.f32.mrf.mxu0
        %v528 = vadd.f32 0.0, %v527
        %v529 = vpop.f32.mrf.mxu0
        %530 = vdwg.mxu0
        %v531 = vmul.f32 %v459, 0.35355338
        %v532 = vmul.f32 %v482, 0.35355338
        %v533 = vmul.f32 %v505, 0.35355338
        %v534 = vmul.f32 %v528, 0.35355338
        %v535 = vadd.f32 %v531, %v353
        %v536 = vadd.f32 %v532, %v353
        %v537 = vadd.f32 %v533, %v353
        %v538 = vadd.f32 %v534, %v353
        %v539 = vsel %vm442, %v535, -inf
        %540 = vmax.xlane.f32.xlu0 %v539
        %v541 = vpop.xlane.xlu0 %540
        %v542 = vsel %vm442, %v536, -inf
        %543 = vmax.xlane.f32.xlu0 %v542
        %v544 = vpop.xlane.xlu0 %543
        %v545 = vsel %vm442, %v537, -inf
        %546 = vmax.xlane.f32.xlu0 %v545
        %v547 = vpop.xlane.xlu0 %546
        %v548 = vsel %vm442, %v538, -inf
        %549 = vmax.xlane.f32.xlu0 %v548
        %v550 = vpop.xlane.xlu0 %549
        %v551 = vsub.f32 %v535, %v541
        %v552 = vsub.f32 %v536, %v544
        %v553 = vsub.f32 %v537, %v547
        %v554 = vsub.f32 %v538, %v550
        %v555 = vmul.f32 %v551, 1.442695
        %v556 = vpow.pop %v555
        %v557 = vmul.f32 %v552, 1.442695
        %v558 = vpow.pop %v557
        %v559 = vmul.f32 %v553, 1.442695
        %v560 = vpow.pop %v559
        %v561 = vmul.f32 %v554, 1.442695
        %v562 = vpow.pop %v561
        %v563 = vsel %vm442, %v556, 0.0
        %564 = vadd.xlane.f32.xlu0 %v563
        %v565 = vpop.xlane.xlu0 %564
        %v566 = vsel %vm442, %v558, 0.0
        %567 = vadd.xlane.f32.xlu0 %v566
        %v568 = vpop.xlane.xlu0 %567
        %v569 = vsel %vm442, %v560, 0.0
        %570 = vadd.xlane.f32.xlu0 %v569
        %v571 = vpop.xlane.xlu0 %570
        %v572 = vsel %vm442, %v562, 0.0
        %573 = vadd.xlane.f32.xlu0 %v572
        %v574 = vpop.xlane.xlu0 %573
        %v575 = vrcp.pop %v565
        %v576 = vrcp.pop %v568
        %v577 = vrcp.pop %v571
        %v578 = vrcp.pop %v574
        %v579 = vmul.f32 %v556, %v575
        %v580 = vmul.f32 %v558, %v576
        %v581 = vmul.f32 %v560, %v577
        %v582 = vmul.f32 %v562, %v578
        %v583 = vpack.c.bf16 %v579, %v579
        %584 = vrot.lane.b32.xlu0 %v439, 64
        %v585 = vpop.permute.xlu0 %584
        %v587 = vsel %vm442, %v583, 0
        %vm589 = vcmask 1043456
        %v591 = vsel %vm589, %v585, 0
        %593 = vmatpush.bf16.msra.mxu0 0
        %594 = vmatpush.bf16.msra.mxu0 0
        %595 = vmatpush.bf16.msra.mxu0 0
        %596 = vmatpush.bf16.msra.mxu0 0
        %597 = vmatpush.bf16.msra.mxu0 0
        %598 = vmatpush.bf16.msra.mxu0 0
        %599 = vmatpush.bf16.msra.mxu0 0
        %600 = vmatpush.bf16.msra.mxu0 %v591
        %601 = vmatmul.bf16.gmra.mxu0 %v587
        %v602 = vpop.f32.mrf.mxu0
        %v603 = vadd.f32 0.0, %v602
        %v604 = vpop.f32.mrf.mxu0
        %605 = vdwg.mxu0
        %v606 = vpack.c.bf16 %v580, %v580
        %607 = vrot.lane.b32.xlu0 %v439, 56
        %v608 = vpop.permute.xlu0 %607
        %v610 = vsel %vm442, %v606, 0
        %v613 = vsel %vm589, %v608, 0
        %615 = vmatpush.bf16.msra.mxu0 0
        %616 = vmatpush.bf16.msra.mxu0 0
        %617 = vmatpush.bf16.msra.mxu0 0
        %618 = vmatpush.bf16.msra.mxu0 0
        %619 = vmatpush.bf16.msra.mxu0 0
        %620 = vmatpush.bf16.msra.mxu0 0
        %621 = vmatpush.bf16.msra.mxu0 0
        %622 = vmatpush.bf16.msra.mxu0 %v613
        %623 = vmatmul.bf16.gmra.mxu0 %v610
        %v624 = vpop.f32.mrf.mxu0
        %v625 = vadd.f32 0.0, %v624
        %v626 = vpop.f32.mrf.mxu0
        %627 = vdwg.mxu0
        %v628 = vpack.c.bf16 %v581, %v581
        %629 = vrot.lane.b32.xlu0 %v439, 48
        %v630 = vpop.permute.xlu0 %629
        %v632 = vsel %vm442, %v628, 0
        %v635 = vsel %vm589, %v630, 0
        %637 = vmatpush.bf16.msra.mxu0 0
        %638 = vmatpush.bf16.msra.mxu0 0
        %639 = vmatpush.bf16.msra.mxu0 0
        %640 = vmatpush.bf16.msra.mxu0 0
        %641 = vmatpush.bf16.msra.mxu0 0
        %642 = vmatpush.bf16.msra.mxu0 0
        %643 = vmatpush.bf16.msra.mxu0 0
        %644 = vmatpush.bf16.msra.mxu0 %v635
        %645 = vmatmul.bf16.gmra.mxu0 %v632
        %v646 = vpop.f32.mrf.mxu0
        %v647 = vadd.f32 0.0, %v646
        %v648 = vpop.f32.mrf.mxu0
        %649 = vdwg.mxu0
        %v650 = vpack.c.bf16 %v582, %v582
        %651 = vrot.lane.b32.xlu0 %v439, 40
        %v652 = vpop.permute.xlu0 %651
        %v654 = vsel %vm442, %v650, 0
        %v657 = vsel %vm589, %v652, 0
        %659 = vmatpush.bf16.msra.mxu0 0
        %660 = vmatpush.bf16.msra.mxu0 0
        %661 = vmatpush.bf16.msra.mxu0 0
        %662 = vmatpush.bf16.msra.mxu0 0
        %663 = vmatpush.bf16.msra.mxu0 0
        %664 = vmatpush.bf16.msra.mxu0 0
        %665 = vmatpush.bf16.msra.mxu0 0
        %666 = vmatpush.bf16.msra.mxu0 %v657
        %667 = vmatmul.bf16.gmra.mxu0 %v654
        %v668 = vpop.f32.mrf.mxu0
        %v669 = vadd.f32 0.0, %v668
        %v670 = vpop.f32.mrf.mxu0
        %671 = vdwg.mxu0
        %673 = vrot.lane.b32.xlu0 %v625, 8
        %v674 = vpop.permute.xlu0 %673
        %677 = vrot.lane.b32.xlu0 %v647, 16
        %v678 = vpop.permute.xlu0 %677
        %681 = vrot.lane.b32.xlu0 %v669, 24
        %v682 = vpop.permute.xlu0 %681
        %v684 = vsel %vm442, %v603, %v674
        %vm685 = vcmask 130048
        %v686 = vsel %vm685, %v684, %v678
        %vm687 = vcmask 195584
        %v688 = vsel %vm687, %v686, %v682
        %v689 = vpack.c.bf16 %v688, %v688
        %v690 = vperm.slane %v375, 3
        %v695 = vunpack.c.l.b16 %v359
        %v696 = vunpack.c.l.b16 %v360
        %v697 = vunpack.c.l.b16 %v361
        %v698 = vunpack.c.l.b16 %v362
        %v699 = vpack.c.b16 %v696, %v695
        %v700 = vpack.c.b16 %v698, %v697
        %v704 = vsel %vm376, %v689, 0
        %706 = vmatpush.bf16.msra.mxu0 0
        %707 = vmatpush.bf16.msra.mxu0 0
        %708 = vmatpush.bf16.msra.mxu0 0
        %709 = vmatpush.bf16.msra.mxu0 0
        %710 = vmatpush.bf16.msra.mxu0 0
        %711 = vmatpush.bf16.msra.mxu0 0
        %712 = vmatpush.bf16.msra.mxu0 %v700
        %713 = vmatpush.bf16.msra.mxu0 %v699
        %714 = vmatmul.bf16.gmra.mxu0 %v704
        %v715 = vpop.f32.mrf.mxu0
        %v716 = vadd.f32 %v690, %v715
        %v717 = vpop.f32.mrf.mxu0
        %718 = vdwg.mxu0
        %v719 = vadd.f32 %v348, %v716
        %v720 = vsel %vm376, %v719, 0.0
        %721 = vadd.xlane.f32.xlu0 %v720
        %v722 = vpop.xlane.xlu0 %721
        %v723 = vmul.f32 %v722, 0.03125
        %v724 = vsub.f32 %v719, %v723
        %v725 = vmul.f32 %v724, %v724
        %v726 = vsel %vm376, %v725, 0.0
        %727 = vadd.xlane.f32.xlu0 %v726
        %v728 = vpop.xlane.xlu0 %727
        %v729 = vmul.f32 %v728, 0.032258064
        %v730 = vrsqrt.pop %v729
        %v731 = vmul.f32 %v730, %v729
        %v732 = vmul.f32 %v731, %v730
        %v733 = vmul.f32 0.5, %v732
        %v734 = vsub.f32 1.5, %v733
        %v735 = vmul.f32 %v730, %v734
        %v736 = vmul.f32 %v729, %v735
        %vm737 = vcmp.eq.f32.partialorder %v729, inf
        %v738 = vsel %vm737, %v729, %v736
        %vm739 = vcmp.eq.f32.partialorder %v729, 0.0
        %v740 = vand.u32 %v729, 2147483648
        %v741 = vsel %vm739, %v740, %v738
        %v742 = vadd.f32 %v741, 1e-06
        %v743 = vrcp.pop %v742
        %v744 = vperm.slane %v375, 4
        %v745 = vmul.f32 %v744, %v724
        %v746 = vmul.f32 %v745, %v743
        %v747 = vperm.slane %v375, 5
        %v748 = vadd.f32 %v746, %v747
        %v749 = vpack.c.bf16 %v748, %v748
        %v750 = vperm.slane %v375, 6
        %v755 = vunpack.c.l.b16 %v363
        %v756 = vunpack.c.l.b16 %v364
        %v757 = vunpack.c.l.b16 %v365
        %v758 = vunpack.c.l.b16 %v366
        %v759 = vpack.c.b16 %v756, %v755
        %v760 = vpack.c.b16 %v758, %v757
        %v764 = vsel %vm376, %v749, 0
        %766 = vmatpush.bf16.msra.mxu0 0
        %767 = vmatpush.bf16.msra.mxu0 0
        %768 = vmatpush.bf16.msra.mxu0 0
        %769 = vmatpush.bf16.msra.mxu0 0
        %770 = vmatpush.bf16.msra.mxu0 0
        %771 = vmatpush.bf16.msra.mxu0 0
        %772 = vmatpush.bf16.msra.mxu0 %v760
        %773 = vmatpush.bf16.msra.mxu0 %v759
        %774 = vmatmul.bf16.gmra.mxu0 %v764
        %v775 = vpop.f32.mrf.mxu0
        %v776 = vadd.f32 %v750, %v775
        %v777 = vpop.f32.mrf.mxu0
        %778 = vdwg.mxu0
        %v779 = vmax.f32 %v776, 0.0
        %v780 = vpack.c.bf16 %v779, %v779
        %v789 = vunpack.c.l.b16 %v367
        %v790 = vunpack.c.l.b16 %v368
        %v791 = vunpack.c.l.b16 %v369
        %v792 = vunpack.c.l.b16 %v370
        %v793 = vunpack.c.l.b16 %v371
        %v794 = vunpack.c.l.b16 %v372
        %v795 = vunpack.c.l.b16 %v373
        %v796 = vunpack.c.l.b16 %v374
        %v797 = vpack.c.b16 %v790, %v789
        %v798 = vpack.c.b16 %v792, %v791
        %v799 = vpack.c.b16 %v794, %v793
        %v800 = vpack.c.b16 %v796, %v795
        %vm805 = vcmask 523264
        %v807 = vsel %vm805, %v780, 0
        %809 = vmatpush.bf16.msra.mxu0 0
        %810 = vmatpush.bf16.msra.mxu0 0
        %811 = vmatpush.bf16.msra.mxu0 0
        %812 = vmatpush.bf16.msra.mxu0 0
        %813 = vmatpush.bf16.msra.mxu0 %v800
        %814 = vmatpush.bf16.msra.mxu0 %v799
        %815 = vmatpush.bf16.msra.mxu0 %v798
        %816 = vmatpush.bf16.msra.mxu0 %v797
        %817 = vmatmul.bf16.gmra.mxu0 %v807
        %v818 = vpop.f32.mrf.mxu0
        %v819 = vadd.f32 0.0, %v818
        %v820 = vpop.f32.mrf.mxu0
        %821 = vdwg.mxu0
        %v822 = vadd.f32 %v719, %v819
        %v823 = vperm.slane %v375, 7
        %v824 = vadd.f32 %v822, %v823
        %s825 = scalar_lea.vmem %s2, 16
        %v826 = vld [vmem:[%s825] sm:$0xf]
        %v827 = vld [vmem:[%s825 + $0x4] sm:$0xf]
        %v828 = vld [vmem:[%s825 + $0x8] sm:$0xf]
        %v829 = vld [vmem:[%s825 + $0xc] sm:$0xf]
        %s830 = scalar_lea.vmem %s3, 16
        %v831 = vld [vmem:[%s830] sm:$0xf]
        %v832 = vld [vmem:[%s830 + $0x4] sm:$0xf]
        %v833 = vld [vmem:[%s830 + $0x8] sm:$0xf]
        %v834 = vld [vmem:[%s830 + $0xc] sm:$0xf]
        %s835 = scalar_lea.vmem %s4, 16
        %v836 = vld [vmem:[%s835] sm:$0xf]
        %v837 = vld [vmem:[%s835 + $0x4] sm:$0xf]
        %v838 = vld [vmem:[%s835 + $0x8] sm:$0xf]
        %v839 = vld [vmem:[%s835 + $0xc] sm:$0xf]
        %s840 = scalar_lea.vmem %s5, 32
        %v841 = vld [vmem:[%s840] sm:$0xf]
        %v842 = vld [vmem:[%s840 + $0x4] sm:$0xf]
        %v843 = vld [vmem:[%s840 + $0x8] sm:$0xf]
        %v844 = vld [vmem:[%s840 + $0xc] sm:$0xf]
        %v845 = vld [vmem:[%s840 + $0x10] sm:$0xf]
        %v846 = vld [vmem:[%s840 + $0x14] sm:$0xf]
        %v847 = vld [vmem:[%s840 + $0x18] sm:$0xf]
        %v848 = vld [vmem:[%s840 + $0x1c] sm:$0xf]
        %s849 = scalar_lea.vmem [#allocation7], 8
        %v850 = vld [vmem:[%s849] sm:$0xff]
        %v851 = vsel %vm376, %v824, 0.0
        %852 = vadd.xlane.f32.xlu0 %v851
        %v853 = vpop.xlane.xlu0 %852
        %v854 = vmul.f32 %v853, 0.03125
        %v855 = vsub.f32 %v824, %v854
        %v856 = vmul.f32 %v855, %v855
        %v857 = vsel %vm376, %v856, 0.0
        %858 = vadd.xlane.f32.xlu0 %v857
        %v859 = vpop.xlane.xlu0 %858
        %v860 = vmul.f32 %v859, 0.032258064
        %v861 = vrsqrt.pop %v860
        %v862 = vmul.f32 %v861, %v860
        %v863 = vmul.f32 %v862, %v861
        %v864 = vmul.f32 0.5, %v863
        %v865 = vsub.f32 1.5, %v864
        %v866 = vmul.f32 %v861, %v865
        %v867 = vmul.f32 %v860, %v866
        %vm868 = vcmp.eq.f32.partialorder %v860, inf
        %v869 = vsel %vm868, %v860, %v867
        %vm870 = vcmp.eq.f32.partialorder %v860, 0.0
        %v871 = vand.u32 %v860, 2147483648
        %v872 = vsel %vm870, %v871, %v869
        %v873 = vadd.f32 %v872, 1e-06
        %v874 = vrcp.pop %v873
        %v875 = vperm.slane %v850, 0
        %v876 = vmul.f32 %v875, %v855
        %v877 = vmul.f32 %v876, %v874
        %v878 = vperm.slane %v850, 1
        %v879 = vadd.f32 %v877, %v878
        %v880 = vpack.c.bf16 %v879, %v879
        %v881 = vperm.slane %v850, 2
        %v886 = vunpack.c.l.b16 %v826
        %v887 = vunpack.c.l.b16 %v827
        %v888 = vunpack.c.l.b16 %v828
        %v889 = vunpack.c.l.b16 %v829
        %v890 = vpack.c.b16 %v887, %v886
        %v891 = vpack.c.b16 %v889, %v888
        %v895 = vsel %vm376, %v880, 0
        %897 = vmatpush.bf16.msra.mxu0 0
        %898 = vmatpush.bf16.msra.mxu0 0
        %899 = vmatpush.bf16.msra.mxu0 0
        %900 = vmatpush.bf16.msra.mxu0 0
        %901 = vmatpush.bf16.msra.mxu0 0
        %902 = vmatpush.bf16.msra.mxu0 0
        %903 = vmatpush.bf16.msra.mxu0 %v891
        %904 = vmatpush.bf16.msra.mxu0 %v890
        %905 = vmatmul.bf16.gmra.mxu0 %v895
        %v906 = vpop.f32.mrf.mxu0
        %v907 = vadd.f32 %v881, %v906
        %v908 = vpop.f32.mrf.mxu0
        %909 = vdwg.mxu0
        %v910 = vpack.c.bf16 %v907, %v907
        %v912 = vunpack.c.l.b16 %v910
        %v913 = vpack.c.b16 %v912, %v912
        %914 = vrot.lane.b32.xlu0 %v913, 96
        %v915 = vpop.permute.xlu0 %914
        %v917 = vsel %vm442, %v910, 0
        %v920 = vsel %vm442, %v915, 0
        %922 = vmatpush.bf16.xpose.msra.mxu0 0
        %923 = vmatpush.bf16.xpose.msra.mxu0 0
        %924 = vmatpush.bf16.xpose.msra.mxu0 0
        %925 = vmatpush.bf16.xpose.msra.mxu0 0
        %926 = vmatpush.bf16.xpose.msra.mxu0 0
        %927 = vmatpush.bf16.xpose.msra.mxu0 0
        %928 = vmatpush.bf16.xpose.msra.mxu0 0
        %929 = vmatpush.bf16.xpose.msra.mxu0 %v920
        %930 = vmatmul.bf16.gmra.mxu0 %v917
        %v931 = vpop.f32.mrf.mxu0
        %v932 = vadd.f32 0.0, %v931
        %v933 = vpop.f32.mrf.mxu0
        %934 = vdwg.mxu0
        %935 = vrot.lane.b32.xlu0 %v913, 120
        %v936 = vpop.permute.xlu0 %935
        %937 = vrot.lane.b32.xlu0 %v913, 88
        %v938 = vpop.permute.xlu0 %937
        %v940 = vsel %vm442, %v936, 0
        %v943 = vsel %vm442, %v938, 0
        %945 = vmatpush.bf16.xpose.msra.mxu0 0
        %946 = vmatpush.bf16.xpose.msra.mxu0 0
        %947 = vmatpush.bf16.xpose.msra.mxu0 0
        %948 = vmatpush.bf16.xpose.msra.mxu0 0
        %949 = vmatpush.bf16.xpose.msra.mxu0 0
        %950 = vmatpush.bf16.xpose.msra.mxu0 0
        %951 = vmatpush.bf16.xpose.msra.mxu0 0
        %952 = vmatpush.bf16.xpose.msra.mxu0 %v943
        %953 = vmatmul.bf16.gmra.mxu0 %v940
        %v954 = vpop.f32.mrf.mxu0
        %v955 = vadd.f32 0.0, %v954
        %v956 = vpop.f32.mrf.mxu0
        %957 = vdwg.mxu0
        %958 = vrot.lane.b32.xlu0 %v913, 112
        %v959 = vpop.permute.xlu0 %958
        %960 = vrot.lane.b32.xlu0 %v913, 80
        %v961 = vpop.permute.xlu0 %960
        %v963 = vsel %vm442, %v959, 0
        %v966 = vsel %vm442, %v961, 0
        %968 = vmatpush.bf16.xpose.msra.mxu0 0
        %969 = vmatpush.bf16.xpose.msra.mxu0 0
        %970 = vmatpush.bf16.xpose.msra.mxu0 0
        %971 = vmatpush.bf16.xpose.msra.mxu0 0
        %972 = vmatpush.bf16.xpose.msra.mxu0 0
        %973 = vmatpush.bf16.xpose.msra.mxu0 0
        %974 = vmatpush.bf16.xpose.msra.mxu0 0
        %975 = vmatpush.bf16.xpose.msra.mxu0 %v966
        %976 = vmatmul.bf16.gmra.mxu0 %v963
        %v977 = vpop.f32.mrf.mxu0
        %v978 = vadd.f32 0.0, %v977
        %v979 = vpop.f32.mrf.mxu0
        %980 = vdwg.mxu0
        %981 = vrot.lane.b32.xlu0 %v913, 104
        %v982 = vpop.permute.xlu0 %981
        %983 = vrot.lane.b32.xlu0 %v913, 72
        %v984 = vpop.permute.xlu0 %983
        %v986 = vsel %vm442, %v982, 0
        %v989 = vsel %vm442, %v984, 0
        %991 = vmatpush.bf16.xpose.msra.mxu0 0
        %992 = vmatpush.bf16.xpose.msra.mxu0 0
        %993 = vmatpush.bf16.xpose.msra.mxu0 0
        %994 = vmatpush.bf16.xpose.msra.mxu0 0
        %995 = vmatpush.bf16.xpose.msra.mxu0 0
        %996 = vmatpush.bf16.xpose.msra.mxu0 0
        %997 = vmatpush.bf16.xpose.msra.mxu0 0
        %998 = vmatpush.bf16.xpose.msra.mxu0 %v989
        %999 = vmatmul.bf16.gmra.mxu0 %v986
        %v1000 = vpop.f32.mrf.mxu0
        %v1001 = vadd.f32 0.0, %v1000
        %v1002 = vpop.f32.mrf.mxu0
        %1003 = vdwg.mxu0
        %v1004 = vmul.f32 %v932, 0.35355338
        %v1005 = vmul.f32 %v955, 0.35355338
        %v1006 = vmul.f32 %v978, 0.35355338
        %v1007 = vmul.f32 %v1001, 0.35355338
        %v1008 = vadd.f32 %v1004, %v353
        %v1009 = vadd.f32 %v1005, %v353
        %v1010 = vadd.f32 %v1006, %v353
        %v1011 = vadd.f32 %v1007, %v353
        %v1012 = vsel %vm442, %v1008, -inf
        %1013 = vmax.xlane.f32.xlu0 %v1012
        %v1014 = vpop.xlane.xlu0 %1013
        %v1015 = vsel %vm442, %v1009, -inf
        %1016 = vmax.xlane.f32.xlu0 %v1015
        %v1017 = vpop.xlane.xlu0 %1016
        %v1018 = vsel %vm442, %v1010, -inf
        %1019 = vmax.xlane.f32.xlu0 %v1018
        %v1020 = vpop.xlane.xlu0 %1019
        %v1021 = vsel %vm442, %v1011, -inf
        %1022 = vmax.xlane.f32.xlu0 %v1021
        %v1023 = vpop.xlane.xlu0 %1022
        %v1024 = vsub.f32 %v1008, %v1014
        %v1025 = vsub.f32 %v1009, %v1017
        %v1026 = vsub.f32 %v1010, %v1020
        %v1027 = vsub.f32 %v1011, %v1023
        %v1028 = vmul.f32 %v1024, 1.442695
        %v1029 = vpow.pop %v1028
        %v1030 = vmul.f32 %v1025, 1.442695
        %v1031 = vpow.pop %v1030
        %v1032 = vmul.f32 %v1026, 1.442695
        %v1033 = vpow.pop %v1032
        %v1034 = vmul.f32 %v1027, 1.442695
        %v1035 = vpow.pop %v1034
        %v1036 = vsel %vm442, %v1029, 0.0
        %1037 = vadd.xlane.f32.xlu0 %v1036
        %v1038 = vpop.xlane.xlu0 %1037
        %v1039 = vsel %vm442, %v1031, 0.0
        %1040 = vadd.xlane.f32.xlu0 %v1039
        %v1041 = vpop.xlane.xlu0 %1040
        %v1042 = vsel %vm442, %v1033, 0.0
        %1043 = vadd.xlane.f32.xlu0 %v1042
        %v1044 = vpop.xlane.xlu0 %1043
        %v1045 = vsel %vm442, %v1035, 0.0
        %1046 = vadd.xlane.f32.xlu0 %v1045
        %v1047 = vpop.xlane.xlu0 %1046
        %v1048 = vrcp.pop %v1038
        %v1049 = vrcp.pop %v1041
        %v1050 = vrcp.pop %v1044
        %v1051 = vrcp.pop %v1047
        %v1052 = vmul.f32 %v1029, %v1048
        %v1053 = vmul.f32 %v1031, %v1049
        %v1054 = vmul.f32 %v1033, %v1050
        %v1055 = vmul.f32 %v1035, %v1051
        %v1056 = vpack.c.bf16 %v1052, %v1052
        %1057 = vrot.lane.b32.xlu0 %v913, 64
        %v1058 = vpop.permute.xlu0 %1057
        %v1060 = vsel %vm442, %v1056, 0
        %v1063 = vsel %vm589, %v1058, 0
        %1065 = vmatpush.bf16.msra.mxu0 0
        %1066 = vmatpush.bf16.msra.mxu0 0
        %1067 = vmatpush.bf16.msra.mxu0 0
        %1068 = vmatpush.bf16.msra.mxu0 0
        %1069 = vmatpush.bf16.msra.mxu0 0
        %1070 = vmatpush.bf16.msra.mxu0 0
        %1071 = vmatpush.bf16.msra.mxu0 0
        %1072 = vmatpush.bf16.msra.mxu0 %v1063
        %1073 = vmatmul.bf16.gmra.mxu0 %v1060
        %v1074 = vpop.f32.mrf.mxu0
        %v1075 = vadd.f32 0.0, %v1074
        %v1076 = vpop.f32.mrf.mxu0
        %1077 = vdwg.mxu0
        %v1078 = vpack.c.bf16 %v1053, %v1053
        %1079 = vrot.lane.b32.xlu0 %v913, 56
        %v1080 = vpop.permute.xlu0 %1079
        %v1082 = vsel %vm442, %v1078, 0
        %v1085 = vsel %vm589, %v1080, 0
        %1087 = vmatpush.bf16.msra.mxu0 0
        %1088 = vmatpush.bf16.msra.mxu0 0
        %1089 = vmatpush.bf16.msra.mxu0 0
        %1090 = vmatpush.bf16.msra.mxu0 0
        %1091 = vmatpush.bf16.msra.mxu0 0
        %1092 = vmatpush.bf16.msra.mxu0 0
        %1093 = vmatpush.bf16.msra.mxu0 0
        %1094 = vmatpush.bf16.msra.mxu0 %v1085
        %1095 = vmatmul.bf16.gmra.mxu0 %v1082
        %v1096 = vpop.f32.mrf.mxu0
        %v1097 = vadd.f32 0.0, %v1096
        %v1098 = vpop.f32.mrf.mxu0
        %1099 = vdwg.mxu0
        %v1100 = vpack.c.bf16 %v1054, %v1054
        %1101 = vrot.lane.b32.xlu0 %v913, 48
        %v1102 = vpop.permute.xlu0 %1101
        %v1104 = vsel %vm442, %v1100, 0
        %v1107 = vsel %vm589, %v1102, 0
        %1109 = vmatpush.bf16.msra.mxu0 0
        %1110 = vmatpush.bf16.msra.mxu0 0
        %1111 = vmatpush.bf16.msra.mxu0 0
        %1112 = vmatpush.bf16.msra.mxu0 0
        %1113 = vmatpush.bf16.msra.mxu0 0
        %1114 = vmatpush.bf16.msra.mxu0 0
        %1115 = vmatpush.bf16.msra.mxu0 0
        %1116 = vmatpush.bf16.msra.mxu0 %v1107
        %1117 = vmatmul.bf16.gmra.mxu0 %v1104
        %v1118 = vpop.f32.mrf.mxu0
        %v1119 = vadd.f32 0.0, %v1118
        %v1120 = vpop.f32.mrf.mxu0
        %1121 = vdwg.mxu0
        %v1122 = vpack.c.bf16 %v1055, %v1055
        %1123 = vrot.lane.b32.xlu0 %v913, 40
        %v1124 = vpop.permute.xlu0 %1123
        %v1126 = vsel %vm442, %v1122, 0
        %v1129 = vsel %vm589, %v1124, 0
        %1131 = vmatpush.bf16.msra.mxu0 0
        %1132 = vmatpush.bf16.msra.mxu0 0
        %1133 = vmatpush.bf16.msra.mxu0 0
        %1134 = vmatpush.bf16.msra.mxu0 0
        %1135 = vmatpush.bf16.msra.mxu0 0
        %1136 = vmatpush.bf16.msra.mxu0 0
        %1137 = vmatpush.bf16.msra.mxu0 0
        %1138 = vmatpush.bf16.msra.mxu0 %v1129
        %1139 = vmatmul.bf16.gmra.mxu0 %v1126
        %v1140 = vpop.f32.mrf.mxu0
        %v1141 = vadd.f32 0.0, %v1140
        %v1142 = vpop.f32.mrf.mxu0
        %1143 = vdwg.mxu0
        %1145 = vrot.lane.b32.xlu0 %v1097, 8
        %v1146 = vpop.permute.xlu0 %1145
        %1149 = vrot.lane.b32.xlu0 %v1119, 16
        %v1150 = vpop.permute.xlu0 %1149
        %1153 = vrot.lane.b32.xlu0 %v1141, 24
        %v1154 = vpop.permute.xlu0 %1153
        %v1156 = vsel %vm442, %v1075, %v1146
        %v1157 = vsel %vm685, %v1156, %v1150
        %v1158 = vsel %vm687, %v1157, %v1154
        %v1159 = vpack.c.bf16 %v1158, %v1158
        %v1160 = vperm.slane %v850, 3
        %v1165 = vunpack.c.l.b16 %v831
        %v1166 = vunpack.c.l.b16 %v832
        %v1167 = vunpack.c.l.b16 %v833
        %v1168 = vunpack.c.l.b16 %v834
        %v1169 = vpack.c.b16 %v1166, %v1165
        %v1170 = vpack.c.b16 %v1168, %v1167
        %v1174 = vsel %vm376, %v1159, 0
        %1176 = vmatpush.bf16.msra.mxu0 0
        %1177 = vmatpush.bf16.msra.mxu0 0
        %1178 = vmatpush.bf16.msra.mxu0 0
        %1179 = vmatpush.bf16.msra.mxu0 0
        %1180 = vmatpush.bf16.msra.mxu0 0
        %1181 = vmatpush.bf16.msra.mxu0 0
        %1182 = vmatpush.bf16.msra.mxu0 %v1170
        %1183 = vmatpush.bf16.msra.mxu0 %v1169
        %1184 = vmatmul.bf16.gmra.mxu0 %v1174
        %v1185 = vpop.f32.mrf.mxu0
        %v1186 = vadd.f32 %v1160, %v1185
        %v1187 = vpop.f32.mrf.mxu0
        %1188 = vdwg.mxu0
        %v1189 = vadd.f32 %v824, %v1186
        %v1190 = vsel %vm376, %v1189, 0.0
        %1191 = vadd.xlane.f32.xlu0 %v1190
        %v1192 = vpop.xlane.xlu0 %1191
        %v1193 = vmul.f32 %v1192, 0.03125
        %v1194 = vsub.f32 %v1189, %v1193
        %v1195 = vmul.f32 %v1194, %v1194
        %v1196 = vsel %vm376, %v1195, 0.0
        %1197 = vadd.xlane.f32.xlu0 %v1196
        %v1198 = vpop.xlane.xlu0 %1197
        %v1199 = vmul.f32 %v1198, 0.032258064
        %v1200 = vrsqrt.pop %v1199
        %v1201 = vmul.f32 %v1200, %v1199
        %v1202 = vmul.f32 %v1201, %v1200
        %v1203 = vmul.f32 0.5, %v1202
        %v1204 = vsub.f32 1.5, %v1203
        %v1205 = vmul.f32 %v1200, %v1204
        %v1206 = vmul.f32 %v1199, %v1205
        %vm1207 = vcmp.eq.f32.partialorder %v1199, inf
        %v1208 = vsel %vm1207, %v1199, %v1206
        %vm1209 = vcmp.eq.f32.partialorder %v1199, 0.0
        %v1210 = vand.u32 %v1199, 2147483648
        %v1211 = vsel %vm1209, %v1210, %v1208
        %v1212 = vadd.f32 %v1211, 1e-06
        %v1213 = vrcp.pop %v1212
        %v1214 = vperm.slane %v850, 4
        %v1215 = vmul.f32 %v1214, %v1194
        %v1216 = vmul.f32 %v1215, %v1213
        %v1217 = vperm.slane %v850, 5
        %v1218 = vadd.f32 %v1216, %v1217
        %v1219 = vpack.c.bf16 %v1218, %v1218
        %v1220 = vperm.slane %v850, 6
        %v1225 = vunpack.c.l.b16 %v836
        %v1226 = vunpack.c.l.b16 %v837
        %v1227 = vunpack.c.l.b16 %v838
        %v1228 = vunpack.c.l.b16 %v839
        %v1229 = vpack.c.b16 %v1226, %v1225
        %v1230 = vpack.c.b16 %v1228, %v1227
        %v1234 = vsel %vm376, %v1219, 0
        %1236 = vmatpush.bf16.msra.mxu0 0
        %1237 = vmatpush.bf16.msra.mxu0 0
        %1238 = vmatpush.bf16.msra.mxu0 0
        %1239 = vmatpush.bf16.msra.mxu0 0
        %1240 = vmatpush.bf16.msra.mxu0 0
        %1241 = vmatpush.bf16.msra.mxu0 0
        %1242 = vmatpush.bf16.msra.mxu0 %v1230
        %1243 = vmatpush.bf16.msra.mxu0 %v1229
        %1244 = vmatmul.bf16.gmra.mxu0 %v1234
        %v1245 = vpop.f32.mrf.mxu0
        %v1246 = vadd.f32 %v1220, %v1245
        %v1247 = vpop.f32.mrf.mxu0
        %1248 = vdwg.mxu0
        %v1249 = vmax.f32 %v1246, 0.0
        %v1250 = vpack.c.bf16 %v1249, %v1249
        %v1259 = vunpack.c.l.b16 %v841
        %v1260 = vunpack.c.l.b16 %v842
        %v1261 = vunpack.c.l.b16 %v843
        %v1262 = vunpack.c.l.b16 %v844
        %v1263 = vunpack.c.l.b16 %v845
        %v1264 = vunpack.c.l.b16 %v846
        %v1265 = vunpack.c.l.b16 %v847
        %v1266 = vunpack.c.l.b16 %v848
        %v1267 = vpack.c.b16 %v1260, %v1259
        %v1268 = vpack.c.b16 %v1262, %v1261
        %v1269 = vpack.c.b16 %v1264, %v1263
        %v1270 = vpack.c.b16 %v1266, %v1265
        %v1276 = vsel %vm805, %v1250, 0
        %1278 = vmatpush.bf16.msra.mxu0 0
        %1279 = vmatpush.bf16.msra.mxu0 0
        %1280 = vmatpush.bf16.msra.mxu0 0
        %1281 = vmatpush.bf16.msra.mxu0 0
        %1282 = vmatpush.bf16.msra.mxu0 %v1270
        %1283 = vmatpush.bf16.msra.mxu0 %v1269
        %1284 = vmatpush.bf16.msra.mxu0 %v1268
        %1285 = vmatpush.bf16.msra.mxu0 %v1267
        %1286 = vmatmul.bf16.gmra.mxu0 %v1276
        %v1287 = vpop.f32.mrf.mxu0
        %v1288 = vadd.f32 0.0, %v1287
        %v1289 = vpop.f32.mrf.mxu0
        %1290 = vdwg.mxu0
        %v1291 = vadd.f32 %v1189, %v1288
        %v1292 = vperm.slane %v850, 7
        %v1293 = vadd.f32 %v1291, %v1292
        %1294 = vst.msk [vmem:[%s346] sm:$0xff] %vm376, %v1293
        %s1295 = sand.u32 %s192, 1
        %s1296 = scalar_lea.sflag [#allocation4], %s1295
        %s1297 = sand.u32 %s192, 1
        %s1298 = smul.addr %s1297, 8
        %s1299 = scalar_lea.vmem [#allocation8], %s1298
        // Predicated region
        $region61: #{tpu_custom_call.1} parent=47 // pred_check
          %p1300 = pneg %p202
        $region62: #{tpu_custom_call.1} parent=47 // pred_check_branch
          %1302 = sbr.rel (%p1300) target = $region64
        $region63: #{tpu_custom_call.1} parent=47 // pred_region
          %1304 = vsyncadd %s1296, 0
          %s1305 = smul.addr %s27, 8
          %s1306 = scalar_lea.hbm %s7, %s1305
          %s1308 = sshll.u32 %s1299, 4
          %s1309 = int_to_ptr.vmem [resolvable:$true] %s1308
          %s1310 = sshll.u32 %s1306, 4
          %s1311 = int_to_ptr.hbm [resolvable:$true] %s1310
          %1313 = dma.vmem_to_hbm [thread:$0]  %s1309, 128, %s1311, %s1296
        $region64: #{tpu_custom_call.1} parent=47 // pred_fallthru
          _
      $region48: #{tpu_custom_call.1} parent=5 // pred_fallthru
        _
      %p1314 = scmp.le.s32.totalorder 2, %s22
      // Predicated region
      $region65: #{tpu_custom_call.1} parent=5 // pred_check
        %p1315 = pneg %p1314
      $region66: #{tpu_custom_call.1} parent=5 // pred_check_branch
        %1317 = sbr.rel (%p1315) target = $region68
      $region67: #{tpu_custom_call.1} parent=5 // pred_region
        %s1318 = ssub.s32 %s22, 2
        // Predicated region
        $region69: #{tpu_custom_call.1} parent=67 // pred_check
          %p1319 = pneg %p208
        $region70: #{tpu_custom_call.1} parent=67 // pred_check_branch
          %1321 = sbr.rel (%p1319) target = $region72
        $region71: #{tpu_custom_call.1} parent=67 // pred_region
          %s1322 = sand.u32 %s193, 1
          %s1323 = scalar_lea.sflag [#allocation4], %s1322
          %s1324 = sand.u32 %s193, 1
          %s1325 = smul.addr %s1324, 8
          %s1326 = scalar_lea.vmem [#allocation8], %s1325
          %1328 = dma.done %s1323, 128
        $region72: #{tpu_custom_call.1} parent=67 // pred_fallthru
          _
      $region68: #{tpu_custom_call.1} parent=5 // pred_fallthru
        _
    $region6: #{tpu_custom_call.1} parent=1 // loop_footer
      %s26 = sadd.s32 1, %s22
    $region7: #{tpu_custom_call.1} parent=1 // loop_footer_branch
      %21 = sbr.rel target = $region3
    $region8: #{tpu_custom_call.1} parent=1 // loop_exit
      _
    %1329 = vsyncpa [#allocation3], 1
    %s1330 = scalar_lea.sflag [#allocation3], 1
    %1331 = vsyncpa %s1330, 1
    %1332 = vsyncpa [#allocation6], 1
    %s1333 = scalar_lea.sflag [#allocation6], 1
    %1334 = vsyncpa %s1333, 1
    %1335 = vsyncpa [#allocation4], 1
    %s1336 = scalar_lea.sflag [#allocation4], 1
    %1337 = vsyncpa %s1336, 1

</llo_original>
